<compile_context>
chip_gen: v7x
topology: tpu7x:2x2x1
jax: 0.10.0
libtpu: 0.0.40
codegen_flags: <defaults>
</compile_context>

<pallas_src>
import jax
import jax.numpy as jnp
from jax.experimental import pallas as pl
from jax.experimental.pallas import tpu as pltpu

EPS = 1e-5
LANE = 128


def _round_up(x, m):
    return (x + m - 1) // m * m


# ------------------------------ fused kernel --------------------------------
def fused_kernel(x34_sub_ref, x34_r1_ref, x34_r2_ref, x21_sub_ref,
                 g1_ref, b1_ref, w_ref, g2_ref, b2_ref, o_ref):
    # BN1 batch statistics: single pass (sum + sum-of-squares) over the
    # disjoint partition of x34.  Padded channels are all-zero -> their
    # folded scale/shift come out exactly 0.
    x_sub = x34_sub_ref[...]                                   # (Msub, Cp_in)
    x_r1 = x34_r1_ref[...]                                     # (even h, odd w)
    x_r2 = x34_r2_ref[...]                                     # (odd h, all w)
    m_total = x_sub.shape[0] + x_r1.shape[0] + x_r2.shape[0]   # = N*H*W

    s1 = (jnp.sum(x_sub, axis=0, keepdims=True)
          + jnp.sum(x_r1, axis=0, keepdims=True)
          + jnp.sum(x_r2, axis=0, keepdims=True))
    ss1 = (jnp.sum(x_sub * x_sub, axis=0, keepdims=True)
           + jnp.sum(x_r1 * x_r1, axis=0, keepdims=True)
           + jnp.sum(x_r2 * x_r2, axis=0, keepdims=True))
    mean1 = s1 / m_total
    var1 = jnp.maximum(ss1 / m_total - mean1 * mean1, 0.0)     # guard rounding
    scale1 = jax.lax.rsqrt(var1 + EPS) * g1_ref[...]           # fold BN1
    shift1 = b1_ref[...] - mean1 * scale1

    # BN1-apply + residual add + ReLU, only on the stride-2-subsampled rows.
    x37 = jnp.maximum(x21_sub_ref[...] + x_sub * scale1 + shift1, 0.0)

    # 1x1 stride-2 conv == channel matmul on the MXU; weight is already
    # (Cp_in, Cp_out) bf16, so this is a plain (M,K)x(K,N) contraction.
    z = jnp.dot(x37.astype(jnp.bfloat16), w_ref[...],
                preferred_element_type=jnp.float32)            # (Msub, Cp_out)

    # BN2 (training-mode batch stats), single-pass sum / sum-of-squares.
    ms = z.shape[0]
    mean2 = jnp.sum(z, axis=0, keepdims=True) / ms
    var2 = jnp.maximum(jnp.sum(z * z, axis=0, keepdims=True) / ms
                       - mean2 * mean2, 0.0)
    scale2 = jax.lax.rsqrt(var2 + EPS) * g2_ref[...]
    shift2 = b2_ref[...] - mean2 * scale2
    o_ref[...] = z * scale2 + shift2


# ------------------------------ host wrapper --------------------------------
def forward(x34_nchw, x21_nchw, params):
    g1, b1, w_conv, g2, b2 = params
    N, C_in, H, W = x34_nchw.shape
    C_out = w_conv.shape[0]
    Ho, Wo = (H - 1) // 2 + 1, (W - 1) // 2 + 1                 # 1x1, stride 2
    Cp_in, Cp_out = _round_up(C_in, LANE), _round_up(C_out, LANE)
    M, Msub = N * H * W, N * Ho * Wo

    def to_rows(x_nchw_piece, cp):
        # NCHW slab -> channel-last rows, zero-padded to a 128-lane multiple.
        n, c, h, w = x_nchw_piece.shape
        x = jnp.transpose(x_nchw_piece, (0, 2, 3, 1)).reshape(n * h * w, c)
        return jnp.pad(x, ((0, 0), (0, cp - c)))

    # Subsample in NCHW *before* transposing; partition x34 into disjoint
    # pieces so each element reaches the kernel exactly once.
    x34_sub = to_rows(x34_nchw[:, :, ::2, ::2], Cp_in)          # (Msub, Cp_in)
    x34_r1 = to_rows(x34_nchw[:, :, ::2, 1::2], Cp_in)          # even h, odd w
    x34_r2 = to_rows(x34_nchw[:, :, 1::2, :], Cp_in)            # odd h, all w
    x21_sub = to_rows(x21_nchw[:, :, ::2, ::2], Cp_in)          # (Msub, Cp_in)

    # Conv weight (C_out, C_in, 1, 1) -> host-transposed, zero-padded
    # (Cp_in, Cp_out) bf16 so the kernel gets a clean MXU (M,K)x(K,N) path.
    w_pad = jnp.pad(jnp.transpose(w_conv.reshape(C_out, C_in), (1, 0)),
                    ((0, Cp_in - C_in), (0, Cp_out - C_out))).astype(jnp.bfloat16)

    pad1 = lambda v, cp: jnp.pad(v, (0, cp - v.shape[0])).reshape(1, cp)
    g1p, b1p = pad1(g1, Cp_in), pad1(b1, Cp_in)
    g2p, b2p = pad1(g2, Cp_out), pad1(b2, Cp_out)

    vmem = pl.BlockSpec(memory_space=pltpu.MemorySpace.VMEM)
    cost = pl.CostEstimate(
        flops=2 * Msub * Cp_in * Cp_out
        + 4 * M * Cp_in + 6 * Msub * (Cp_in + Cp_out),
        transcendentals=Cp_in + Cp_out,
        bytes_accessed=4 * (M * Cp_in + Msub * Cp_in + Msub * Cp_out)
        + 2 * Cp_in * Cp_out,
    )

    out_rows = pl.pallas_call(
        fused_kernel,
        out_shape=jax.ShapeDtypeStruct((Msub, Cp_out), jnp.float32),
        in_specs=[vmem] * 9,
        out_specs=vmem,
        cost_estimate=cost,
        compiler_params=pltpu.CompilerParams(
            # Above the 16/32 MiB scoped defaults, safely below v7x's 64 MiB.
            vmem_limit_bytes=48 * 1024 * 1024),
    )(x34_sub, x34_r1, x34_r2, x21_sub, g1p, b1p, w_pad, g2p, b2p)

    out = out_rows[:, :C_out].reshape(N, Ho, Wo, C_out)
    return jnp.transpose(out, (0, 3, 1, 2))                      # back to NCHW


# ------------------------------ pure-JAX reference ---------------------------
def reference(x34_nchw, x21_nchw, params):
    g1, b1, w_conv, g2, b2 = params

    def bn_train(x, g, b):
        mean = jnp.mean(x, axis=(0, 2, 3), keepdims=True)
        var = jnp.mean((x - mean) ** 2, axis=(0, 2, 3), keepdims=True)
        return (x - mean) * jax.lax.rsqrt(var + EPS) * g[None, :, None, None] \
               + b[None, :, None, None]

    x35 = bn_train(x34_nchw, g1, b1)
    x37 = jnp.maximum(x21_nchw + x35, 0.0)
    x38 = jax.lax.conv_general_dilated(
        x37, w_conv, window_strides=(2, 2), padding="VALID",
        dimension_numbers=("NCHW", "OIHW", "NCHW"))
    return bn_train(x38, g2, b2)


if __name__ == "__main__":
    key = jax.random.PRNGKey(0)
    k1, k2, k3, k4, k5, k6, k7 = jax.random.split(key, 7)

    # Small shapes consistent with the module (channels are structural).
    N, C_in, H, W = 2, 224, 16, 16
    C_out = 448

    g1 = 1.0 + 0.1 * jax.random.normal(k1, (C_in,), jnp.float32)
    b1 = 0.1 * jax.random.normal(k2, (C_in,), jnp.float32)
    w_conv = 0.05 * jax.random.normal(k3, (C_out, C_in, 1, 1), jnp.float32)
    g2 = 1.0 + 0.1 * jax.random.normal(k4, (C_out,), jnp.float32)
    b2 = 0.1 * jax.random.normal(k5, (C_out,), jnp.float32)
    params = (g1, b1, w_conv, g2, b2)

    x34 = jax.random.normal(k6, (N, C_in, H, W), jnp.float32)
    x21 = jax.random.normal(k7, (N, C_in, H, W), jnp.float32)

    fwd = jax.jit(forward)
    out = jax.block_until_ready(fwd(x34, x21, params))
    ref = jax.block_until_ready(reference(x34, x21, params))

    Ho, Wo = (H - 1) // 2 + 1, (W - 1) // 2 + 1
    assert out.shape == (N, C_out, Ho, Wo), out.shape
    # Tolerance accounts for the bf16 MXU operands (f32 accumulation); BN2
    # renormalizes, leaving O(1e-2) worst-case deviation vs. the f32 reference.
    assert jnp.allclose(out, ref, atol=2e-2, rtol=2e-2), \
        float(jnp.max(jnp.abs(out - ref)))

    print("KERNEL_OK")
</pallas_src>

<mosaic_0001>
module attributes {stable_mosaic.version = 11 : i64} {
  func.func @fused_kernel(%arg0: memref<128x256xf32, #tpu.memory_space<vmem>>, %arg1: memref<128x256xf32, #tpu.memory_space<vmem>>, %arg2: memref<256x256xf32, #tpu.memory_space<vmem>>, %arg3: memref<128x256xf32, #tpu.memory_space<vmem>>, %arg4: memref<1x256xf32, #tpu.memory_space<vmem>>, %arg5: memref<1x256xf32, #tpu.memory_space<vmem>>, %arg6: memref<256x512xbf16, #tpu.memory_space<vmem>>, %arg7: memref<1x512xf32, #tpu.memory_space<vmem>>, %arg8: memref<1x512xf32, #tpu.memory_space<vmem>>, %arg9: memref<128x512xf32, #tpu.memory_space<vmem>>) attributes {dimension_semantics = [], scalar_prefetch = 0 : i64, scratch_operands = 0 : i64, tpu.core_type = #tpu.core_type<tc>} {
    %c0 = arith.constant 0 : index
    %c0_0 = arith.constant 0 : index
    %0 = vector.load %arg0[%c0, %c0_0] : memref<128x256xf32, #tpu.memory_space<vmem>>, vector<128x256xf32>
    %c0_1 = arith.constant 0 : index
    %c0_2 = arith.constant 0 : index
    %1 = vector.load %arg1[%c0_1, %c0_2] : memref<128x256xf32, #tpu.memory_space<vmem>>, vector<128x256xf32>
    %c0_3 = arith.constant 0 : index
    %c0_4 = arith.constant 0 : index
    %2 = vector.load %arg2[%c0_3, %c0_4] : memref<256x256xf32, #tpu.memory_space<vmem>>, vector<256x256xf32>
    %cst = arith.constant dense<0.000000e+00> : vector<256xf32>
    %3 = vector.multi_reduction <add>, %0, %cst [0] : vector<128x256xf32> to vector<256xf32>
    %4 = vector.shape_cast %3 : vector<256xf32> to vector<1x256xf32>
    %cst_5 = arith.constant dense<0.000000e+00> : vector<256xf32>
    %5 = vector.multi_reduction <add>, %1, %cst_5 [0] : vector<128x256xf32> to vector<256xf32>
    %6 = vector.shape_cast %5 : vector<256xf32> to vector<1x256xf32>
    %7 = arith.addf %4, %6 : vector<1x256xf32>
    %cst_6 = arith.constant dense<0.000000e+00> : vector<256xf32>
    %8 = vector.multi_reduction <add>, %2, %cst_6 [0] : vector<256x256xf32> to vector<256xf32>
    %9 = vector.shape_cast %8 : vector<256xf32> to vector<1x256xf32>
    %10 = arith.addf %7, %9 : vector<1x256xf32>
    %11 = arith.mulf %0, %0 : vector<128x256xf32>
    %cst_7 = arith.constant dense<0.000000e+00> : vector<256xf32>
    %12 = vector.multi_reduction <add>, %11, %cst_7 [0] : vector<128x256xf32> to vector<256xf32>
    %13 = vector.shape_cast %12 : vector<256xf32> to vector<1x256xf32>
    %14 = arith.mulf %1, %1 : vector<128x256xf32>
    %cst_8 = arith.constant dense<0.000000e+00> : vector<256xf32>
    %15 = vector.multi_reduction <add>, %14, %cst_8 [0] : vector<128x256xf32> to vector<256xf32>
    %16 = vector.shape_cast %15 : vector<256xf32> to vector<1x256xf32>
    %17 = arith.addf %13, %16 : vector<1x256xf32>
    %18 = arith.mulf %2, %2 : vector<256x256xf32>
    %cst_9 = arith.constant dense<0.000000e+00> : vector<256xf32>
    %19 = vector.multi_reduction <add>, %18, %cst_9 [0] : vector<256x256xf32> to vector<256xf32>
    %20 = vector.shape_cast %19 : vector<256xf32> to vector<1x256xf32>
    %21 = arith.addf %17, %20 : vector<1x256xf32>
    %cst_10 = arith.constant 5.120000e+02 : f32
    %22 = vector.broadcast %cst_10 : f32 to vector<1x256xf32>
    %23 = arith.divf %10, %22 : vector<1x256xf32>
    %cst_11 = arith.constant 5.120000e+02 : f32
    %24 = vector.broadcast %cst_11 : f32 to vector<1x256xf32>
    %25 = arith.divf %21, %24 : vector<1x256xf32>
    %26 = arith.mulf %23, %23 : vector<1x256xf32>
    %27 = arith.subf %25, %26 : vector<1x256xf32>
    %cst_12 = arith.constant 0.000000e+00 : f32
    %28 = vector.broadcast %cst_12 : f32 to vector<1x256xf32>
    %29 = arith.maximumf %27, %28 : vector<1x256xf32>
    %cst_13 = arith.constant 9.99999974E-6 : f32
    %30 = vector.broadcast %cst_13 : f32 to vector<1x256xf32>
    %31 = arith.addf %29, %30 : vector<1x256xf32>
    %32 = math.rsqrt %31 : vector<1x256xf32>
    %c0_14 = arith.constant 0 : index
    %c0_15 = arith.constant 0 : index
    %33 = vector.load %arg4[%c0_14, %c0_15] : memref<1x256xf32, #tpu.memory_space<vmem>>, vector<1x256xf32>
    %34 = arith.mulf %32, %33 : vector<1x256xf32>
    %c0_16 = arith.constant 0 : index
    %c0_17 = arith.constant 0 : index
    %35 = vector.load %arg5[%c0_16, %c0_17] : memref<1x256xf32, #tpu.memory_space<vmem>>, vector<1x256xf32>
    %36 = arith.mulf %23, %34 : vector<1x256xf32>
    %37 = arith.subf %35, %36 : vector<1x256xf32>
    %c0_18 = arith.constant 0 : index
    %c0_19 = arith.constant 0 : index
    %38 = vector.load %arg3[%c0_18, %c0_19] : memref<128x256xf32, #tpu.memory_space<vmem>>, vector<128x256xf32>
    %39 = vector.broadcast %34 : vector<1x256xf32> to vector<128x256xf32>
    %40 = arith.mulf %0, %39 : vector<128x256xf32>
    %41 = arith.addf %38, %40 : vector<128x256xf32>
    %42 = vector.broadcast %37 : vector<1x256xf32> to vector<128x256xf32>
    %43 = arith.addf %41, %42 : vector<128x256xf32>
    %cst_20 = arith.constant 0.000000e+00 : f32
    %44 = vector.broadcast %cst_20 : f32 to vector<128x256xf32>
    %45 = arith.maximumf %43, %44 : vector<128x256xf32>
    %46 = arith.truncf %45 : vector<128x256xf32> to vector<128x256xbf16>
    %c0_21 = arith.constant 0 : index
    %c0_22 = arith.constant 0 : index
    %47 = vector.load %arg6[%c0_21, %c0_22] : memref<256x512xbf16, #tpu.memory_space<vmem>>, vector<256x512xbf16>
    %cst_23 = arith.constant dense<0.000000e+00> : vector<128x512xf32>
    %48 = tpu.matmul %46, %47, %cst_23 {dimension_numbers = #tpu.dot_dimension_numbers<[1], [0], [0], [1], [0, 0, 1, 1], [], []>} : vector<128x256xbf16>, vector<256x512xbf16>, vector<128x512xf32> -> vector<128x512xf32>
    %cst_24 = arith.constant dense<0.000000e+00> : vector<512xf32>
    %49 = vector.multi_reduction <add>, %48, %cst_24 [0] : vector<128x512xf32> to vector<512xf32>
    %50 = vector.shape_cast %49 : vector<512xf32> to vector<1x512xf32>
    %cst_25 = arith.constant 1.280000e+02 : f32
    %51 = vector.broadcast %cst_25 : f32 to vector<1x512xf32>
    %52 = arith.divf %50, %51 : vector<1x512xf32>
    %53 = arith.mulf %48, %48 : vector<128x512xf32>
    %cst_26 = arith.constant dense<0.000000e+00> : vector<512xf32>
    %54 = vector.multi_reduction <add>, %53, %cst_26 [0] : vector<128x512xf32> to vector<512xf32>
    %55 = vector.shape_cast %54 : vector<512xf32> to vector<1x512xf32>
    %cst_27 = arith.constant 1.280000e+02 : f32
    %56 = vector.broadcast %cst_27 : f32 to vector<1x512xf32>
    %57 = arith.divf %55, %56 : vector<1x512xf32>
    %58 = arith.mulf %52, %52 : vector<1x512xf32>
    %59 = arith.subf %57, %58 : vector<1x512xf32>
    %cst_28 = arith.constant 0.000000e+00 : f32
    %60 = vector.broadcast %cst_28 : f32 to vector<1x512xf32>
    %61 = arith.maximumf %59, %60 : vector<1x512xf32>
    %cst_29 = arith.constant 9.99999974E-6 : f32
    %62 = vector.broadcast %cst_29 : f32 to vector<1x512xf32>
    %63 = arith.addf %61, %62 : vector<1x512xf32>
    %64 = math.rsqrt %63 : vector<1x512xf32>
    %c0_30 = arith.constant 0 : index
    %c0_31 = arith.constant 0 : index
    %65 = vector.load %arg7[%c0_30, %c0_31] : memref<1x512xf32, #tpu.memory_space<vmem>>, vector<1x512xf32>
    %66 = arith.mulf %64, %65 : vector<1x512xf32>
    %c0_32 = arith.constant 0 : index
    %c0_33 = arith.constant 0 : index
    %67 = vector.load %arg8[%c0_32, %c0_33] : memref<1x512xf32, #tpu.memory_space<vmem>>, vector<1x512xf32>
    %68 = arith.mulf %52, %66 : vector<1x512xf32>
    %69 = arith.subf %67, %68 : vector<1x512xf32>
    %70 = vector.broadcast %66 : vector<1x512xf32> to vector<128x512xf32>
    %71 = arith.mulf %48, %70 : vector<128x512xf32>
    %72 = vector.broadcast %69 : vector<1x512xf32> to vector<128x512xf32>
    %73 = arith.addf %71, %72 : vector<128x512xf32>
    %c0_34 = arith.constant 0 : index
    %c0_35 = arith.constant 0 : index
    %74 = vector.load %arg9[%c0_34, %c0_35] : memref<128x512xf32, #tpu.memory_space<vmem>>, vector<128x512xf32>
    tpu.vector_store %arg9[%c0_34, %c0_35], %73 {strides = array<i32>} : memref<128x512xf32, #tpu.memory_space<vmem>>, vector<128x512xf32>,
    return
  }
}

</mosaic_0001>

<llo_original>
// kernel: forward.1
$region0: #{forward.1}
  #allocation0 [shape = 'u32[]', space=smem, size = 0x4, offset = 0x4, fixed_abs, tag = 'smem constant byte address 0x4 - core index']
  #allocation1 [shape = 'u32[144,128]{1,0:T(1,128)}', space=vmem, size = 0x12000, scoped, tag = 'internal scratch']
  %s0 = inlined_call_operand.vmem [shape: f32[128,256], index: 0, kind: input, shape index: {}]
  %s1 = inlined_call_operand.vmem [shape: f32[128,256], index: 1, kind: input, shape index: {}]
  %s2 = inlined_call_operand.vmem [shape: f32[256,256], index: 2, kind: input, shape index: {}]
  %s3 = inlined_call_operand.vmem [shape: f32[128,256], index: 3, kind: input, shape index: {}]
  %s4 = inlined_call_operand.vmem [shape: f32[1,256], index: 4, kind: input, shape index: {}]
  %s5 = inlined_call_operand.vmem [shape: f32[1,256], index: 5, kind: input, shape index: {}]
  %s6 = inlined_call_operand.vmem [shape: bf16[256,512], index: 6, kind: input, shape index: {}]
  %s7 = inlined_call_operand.vmem [shape: f32[1,512], index: 7, kind: input, shape index: {}]
  %s8 = inlined_call_operand.vmem [shape: f32[1,512], index: 8, kind: input, shape index: {}]
  %s9 = inlined_call_operand.hbm [shape: f32[128,512], index: 9, kind: output, shape index: {}]
  %s10 = sld [smem:[#allocation0]]
  $region46: #{forward.1} parent=0
    _
  %s12 = ssub.s32 1, %s10
  %s13 = scalar_select 0, %s12, %s10
  $region1: #{forward.1} parent=0
    #allocation2 [shape = 'u8[262144]{0}', space=vmem, size = 0x40000, scoped, tag = 'output window, operand 0, single buffered']
    #allocation3 [shape = 's32[1]{0}', space=sflag, size = 0x4, scoped, tag = 'scoped memory for forward.1']
    %14 = vsyncpa [#allocation3], 0
    // Predicated region
    $region2: #{forward.1} parent=1 // pred_check
      _
    $region3: #{forward.1} parent=1 // pred_check_branch
      %16 = sbr.rel (0) target = $region5
    $region4: #{forward.1} parent=1 // pred_region
      _
    $region5: #{forward.1} parent=1 // pred_fallthru
      _
    // Predicated region
    $region6: #{forward.1} parent=1 // pred_check
      _
    $region7: #{forward.1} parent=1 // pred_check_branch
      %18 = sbr.rel (0) target = $region9
    $region8: #{forward.1} parent=1 // pred_region
      _
    $region9: #{forward.1} parent=1 // pred_fallthru
      _
    // Predicated region
    $region10: #{forward.1} parent=1 // pred_check
      _
    $region11: #{forward.1} parent=1 // pred_check_branch
      %20 = sbr.rel (0) target = $region13
    $region12: #{forward.1} parent=1 // pred_region
      _
    $region13: #{forward.1} parent=1 // pred_fallthru
      _
    // Predicated region
    $region14: #{forward.1} parent=1 // pred_check
      _
    $region15: #{forward.1} parent=1 // pred_check_branch
      %22 = sbr.rel (0) target = $region17
    $region16: #{forward.1} parent=1 // pred_region
      _
    $region17: #{forward.1} parent=1 // pred_fallthru
      _
    // Predicated region
    $region18: #{forward.1} parent=1 // pred_check
      _
    $region19: #{forward.1} parent=1 // pred_check_branch
      %24 = sbr.rel (0) target = $region21
    $region20: #{forward.1} parent=1 // pred_region
      _
    $region21: #{forward.1} parent=1 // pred_fallthru
      _
    // Predicated region
    $region22: #{forward.1} parent=1 // pred_check
      _
    $region23: #{forward.1} parent=1 // pred_check_branch
      %26 = sbr.rel (0) target = $region25
    $region24: #{forward.1} parent=1 // pred_region
      _
    $region25: #{forward.1} parent=1 // pred_fallthru
      _
    // Predicated region
    $region26: #{forward.1} parent=1 // pred_check
      _
    $region27: #{forward.1} parent=1 // pred_check_branch
      %28 = sbr.rel (0) target = $region29
    $region28: #{forward.1} parent=1 // pred_region
      _
    $region29: #{forward.1} parent=1 // pred_fallthru
      _
    // Predicated region
    $region30: #{forward.1} parent=1 // pred_check
      _
    $region31: #{forward.1} parent=1 // pred_check_branch
      %30 = sbr.rel (0) target = $region33
    $region32: #{forward.1} parent=1 // pred_region
      _
    $region33: #{forward.1} parent=1 // pred_fallthru
      _
    // Predicated region
    $region34: #{forward.1} parent=1 // pred_check
      _
    $region35: #{forward.1} parent=1 // pred_check_branch
      %32 = sbr.rel (0) target = $region37
    $region36: #{forward.1} parent=1 // pred_region
      _
    $region37: #{forward.1} parent=1 // pred_fallthru
      _
    %v33 = vld [vmem:[%s0] sm:$0xff]
    %v34 = vld [vmem:[%s0 + $0x8] sm:$0xff]
    %v35 = vld [vmem:[%s0 + $0x10] sm:$0xff]
    %v36 = vld [vmem:[%s0 + $0x18] sm:$0xff]
    %v37 = vld [vmem:[%s0 + $0x20] sm:$0xff]
    %v38 = vld [vmem:[%s0 + $0x28] sm:$0xff]
    %v39 = vld [vmem:[%s0 + $0x30] sm:$0xff]
    %v40 = vld [vmem:[%s0 + $0x38] sm:$0xff]
    %v41 = vld [vmem:[%s0 + $0x40] sm:$0xff]
    %v42 = vld [vmem:[%s0 + $0x48] sm:$0xff]
    %v43 = vld [vmem:[%s0 + $0x50] sm:$0xff]
    %v44 = vld [vmem:[%s0 + $0x58] sm:$0xff]
    %v45 = vld [vmem:[%s0 + $0x60] sm:$0xff]
    %v46 = vld [vmem:[%s0 + $0x68] sm:$0xff]
    %v47 = vld [vmem:[%s0 + $0x70] sm:$0xff]
    %v48 = vld [vmem:[%s0 + $0x78] sm:$0xff]
    %v49 = vld [vmem:[%s0 + $0x80] sm:$0xff]
    %v50 = vld [vmem:[%s0 + $0x88] sm:$0xff]
    %v51 = vld [vmem:[%s0 + $0x90] sm:$0xff]
    %v52 = vld [vmem:[%s0 + $0x98] sm:$0xff]
    %v53 = vld [vmem:[%s0 + $0xa0] sm:$0xff]
    %v54 = vld [vmem:[%s0 + $0xa8] sm:$0xff]
    %v55 = vld [vmem:[%s0 + $0xb0] sm:$0xff]
    %v56 = vld [vmem:[%s0 + $0xb8] sm:$0xff]
    %v57 = vld [vmem:[%s0 + $0xc0] sm:$0xff]
    %v58 = vld [vmem:[%s0 + $0xc8] sm:$0xff]
    %v59 = vld [vmem:[%s0 + $0xd0] sm:$0xff]
    %v60 = vld [vmem:[%s0 + $0xd8] sm:$0xff]
    %v61 = vld [vmem:[%s0 + $0xe0] sm:$0xff]
    %v62 = vld [vmem:[%s0 + $0xe8] sm:$0xff]
    %v63 = vld [vmem:[%s0 + $0xf0] sm:$0xff]
    %v64 = vld [vmem:[%s0 + $0xf8] sm:$0xff]
    %v65 = vld [vmem:[%s1] sm:$0xff]
    %v66 = vld [vmem:[%s1 + $0x8] sm:$0xff]
    %v67 = vld [vmem:[%s1 + $0x10] sm:$0xff]
    %v68 = vld [vmem:[%s1 + $0x18] sm:$0xff]
    %v69 = vld [vmem:[%s1 + $0x20] sm:$0xff]
    %v70 = vld [vmem:[%s1 + $0x28] sm:$0xff]
    %v71 = vld [vmem:[%s1 + $0x30] sm:$0xff]
    %v72 = vld [vmem:[%s1 + $0x38] sm:$0xff]
    %v73 = vld [vmem:[%s1 + $0x40] sm:$0xff]
    %v74 = vld [vmem:[%s1 + $0x48] sm:$0xff]
    %v75 = vld [vmem:[%s1 + $0x50] sm:$0xff]
    %v76 = vld [vmem:[%s1 + $0x58] sm:$0xff]
    %v77 = vld [vmem:[%s1 + $0x60] sm:$0xff]
    %v78 = vld [vmem:[%s1 + $0x68] sm:$0xff]
    %v79 = vld [vmem:[%s1 + $0x70] sm:$0xff]
    %v80 = vld [vmem:[%s1 + $0x78] sm:$0xff]
    %v81 = vld [vmem:[%s1 + $0x80] sm:$0xff]
    %v82 = vld [vmem:[%s1 + $0x88] sm:$0xff]
    %v83 = vld [vmem:[%s1 + $0x90] sm:$0xff]
    %v84 = vld [vmem:[%s1 + $0x98] sm:$0xff]
    %v85 = vld [vmem:[%s1 + $0xa0] sm:$0xff]
    %v86 = vld [vmem:[%s1 + $0xa8] sm:$0xff]
    %v87 = vld [vmem:[%s1 + $0xb0] sm:$0xff]
    %v88 = vld [vmem:[%s1 + $0xb8] sm:$0xff]
    %v89 = vld [vmem:[%s1 + $0xc0] sm:$0xff]
    %v90 = vld [vmem:[%s1 + $0xc8] sm:$0xff]
    %v91 = vld [vmem:[%s1 + $0xd0] sm:$0xff]
    %v92 = vld [vmem:[%s1 + $0xd8] sm:$0xff]
    %v93 = vld [vmem:[%s1 + $0xe0] sm:$0xff]
    %v94 = vld [vmem:[%s1 + $0xe8] sm:$0xff]
    %v95 = vld [vmem:[%s1 + $0xf0] sm:$0xff]
    %v96 = vld [vmem:[%s1 + $0xf8] sm:$0xff]
    %v97 = vld [vmem:[%s2] sm:$0xff]
    %v98 = vld [vmem:[%s2 + $0x8] sm:$0xff]
    %v99 = vld [vmem:[%s2 + $0x10] sm:$0xff]
    %v100 = vld [vmem:[%s2 + $0x18] sm:$0xff]
    %v101 = vld [vmem:[%s2 + $0x20] sm:$0xff]
    %v102 = vld [vmem:[%s2 + $0x28] sm:$0xff]
    %v103 = vld [vmem:[%s2 + $0x30] sm:$0xff]
    %v104 = vld [vmem:[%s2 + $0x38] sm:$0xff]
    %v105 = vld [vmem:[%s2 + $0x40] sm:$0xff]
    %v106 = vld [vmem:[%s2 + $0x48] sm:$0xff]
    %v107 = vld [vmem:[%s2 + $0x50] sm:$0xff]
    %v108 = vld [vmem:[%s2 + $0x58] sm:$0xff]
    %v109 = vld [vmem:[%s2 + $0x60] sm:$0xff]
    %v110 = vld [vmem:[%s2 + $0x68] sm:$0xff]
    %v111 = vld [vmem:[%s2 + $0x70] sm:$0xff]
    %v112 = vld [vmem:[%s2 + $0x78] sm:$0xff]
    %v113 = vld [vmem:[%s2 + $0x80] sm:$0xff]
    %v114 = vld [vmem:[%s2 + $0x88] sm:$0xff]
    %v115 = vld [vmem:[%s2 + $0x90] sm:$0xff]
    %v116 = vld [vmem:[%s2 + $0x98] sm:$0xff]
    %v117 = vld [vmem:[%s2 + $0xa0] sm:$0xff]
    %v118 = vld [vmem:[%s2 + $0xa8] sm:$0xff]
    %v119 = vld [vmem:[%s2 + $0xb0] sm:$0xff]
    %v120 = vld [vmem:[%s2 + $0xb8] sm:$0xff]
    %v121 = vld [vmem:[%s2 + $0xc0] sm:$0xff]
    %v122 = vld [vmem:[%s2 + $0xc8] sm:$0xff]
    %v123 = vld [vmem:[%s2 + $0xd0] sm:$0xff]
    %v124 = vld [vmem:[%s2 + $0xd8] sm:$0xff]
    %v125 = vld [vmem:[%s2 + $0xe0] sm:$0xff]
    %v126 = vld [vmem:[%s2 + $0xe8] sm:$0xff]
    %v127 = vld [vmem:[%s2 + $0xf0] sm:$0xff]
    %v128 = vld [vmem:[%s2 + $0xf8] sm:$0xff]
    %v129 = vld [vmem:[%s2 + $0x100] sm:$0xff]
    %v130 = vld [vmem:[%s2 + $0x108] sm:$0xff]
    %v131 = vld [vmem:[%s2 + $0x110] sm:$0xff]
    %v132 = vld [vmem:[%s2 + $0x118] sm:$0xff]
    %v133 = vld [vmem:[%s2 + $0x120] sm:$0xff]
    %v134 = vld [vmem:[%s2 + $0x128] sm:$0xff]
    %v135 = vld [vmem:[%s2 + $0x130] sm:$0xff]
    %v136 = vld [vmem:[%s2 + $0x138] sm:$0xff]
    %v137 = vld [vmem:[%s2 + $0x140] sm:$0xff]
    %v138 = vld [vmem:[%s2 + $0x148] sm:$0xff]
    %v139 = vld [vmem:[%s2 + $0x150] sm:$0xff]
    %v140 = vld [vmem:[%s2 + $0x158] sm:$0xff]
    %v141 = vld [vmem:[%s2 + $0x160] sm:$0xff]
    %v142 = vld [vmem:[%s2 + $0x168] sm:$0xff]
    %v143 = vld [vmem:[%s2 + $0x170] sm:$0xff]
    %v144 = vld [vmem:[%s2 + $0x178] sm:$0xff]
    %v145 = vld [vmem:[%s2 + $0x180] sm:$0xff]
    %v146 = vld [vmem:[%s2 + $0x188] sm:$0xff]
    %v147 = vld [vmem:[%s2 + $0x190] sm:$0xff]
    %v148 = vld [vmem:[%s2 + $0x198] sm:$0xff]
    %v149 = vld [vmem:[%s2 + $0x1a0] sm:$0xff]
    %v150 = vld [vmem:[%s2 + $0x1a8] sm:$0xff]
    %v151 = vld [vmem:[%s2 + $0x1b0] sm:$0xff]
    %v152 = vld [vmem:[%s2 + $0x1b8] sm:$0xff]
    %v153 = vld [vmem:[%s2 + $0x1c0] sm:$0xff]
    %v154 = vld [vmem:[%s2 + $0x1c8] sm:$0xff]
    %v155 = vld [vmem:[%s2 + $0x1d0] sm:$0xff]
    %v156 = vld [vmem:[%s2 + $0x1d8] sm:$0xff]
    %v157 = vld [vmem:[%s2 + $0x1e0] sm:$0xff]
    %v158 = vld [vmem:[%s2 + $0x1e8] sm:$0xff]
    %v159 = vld [vmem:[%s2 + $0x1f0] sm:$0xff]
    %v160 = vld [vmem:[%s2 + $0x1f8] sm:$0xff]
    %v161 = vadd.f32 %v33, %v35
    %v162 = vadd.f32 %v161, %v37
    %v163 = vadd.f32 %v162, %v39
    %v164 = vadd.f32 %v163, %v41
    %v165 = vadd.f32 %v164, %v43
    %v166 = vadd.f32 %v165, %v45
    %v167 = vadd.f32 %v166, %v47
    %v168 = vadd.f32 %v167, %v49
    %v169 = vadd.f32 %v168, %v51
    %v170 = vadd.f32 %v169, %v53
    %v171 = vadd.f32 %v170, %v55
    %v172 = vadd.f32 %v171, %v57
    %v173 = vadd.f32 %v172, %v59
    %v174 = vadd.f32 %v173, %v61
    %v175 = vadd.f32 %v174, %v63
    %v176 = vrot.slane %v175, 4
    %v177 = vadd.f32 %v175, %v176
    %v178 = vrot.slane %v177, 2
    %v179 = vadd.f32 %v177, %v178
    %v180 = vrot.slane %v179, 1
    %v181 = vadd.f32 %v179, %v180
    %v182 = vadd.f32 %v34, %v36
    %v183 = vadd.f32 %v182, %v38
    %v184 = vadd.f32 %v183, %v40
    %v185 = vadd.f32 %v184, %v42
    %v186 = vadd.f32 %v185, %v44
    %v187 = vadd.f32 %v186, %v46
    %v188 = vadd.f32 %v187, %v48
    %v189 = vadd.f32 %v188, %v50
    %v190 = vadd.f32 %v189, %v52
    %v191 = vadd.f32 %v190, %v54
    %v192 = vadd.f32 %v191, %v56
    %v193 = vadd.f32 %v192, %v58
    %v194 = vadd.f32 %v193, %v60
    %v195 = vadd.f32 %v194, %v62
    %v196 = vadd.f32 %v195, %v64
    %v197 = vrot.slane %v196, 4
    %v198 = vadd.f32 %v196, %v197
    %v199 = vrot.slane %v198, 2
    %v200 = vadd.f32 %v198, %v199
    %v201 = vrot.slane %v200, 1
    %v202 = vadd.f32 %v200, %v201
    %v203 = vadd.f32 %v65, %v67
    %v204 = vadd.f32 %v203, %v69
    %v205 = vadd.f32 %v204, %v71
    %v206 = vadd.f32 %v205, %v73
    %v207 = vadd.f32 %v206, %v75
    %v208 = vadd.f32 %v207, %v77
    %v209 = vadd.f32 %v208, %v79
    %v210 = vadd.f32 %v209, %v81
    %v211 = vadd.f32 %v210, %v83
    %v212 = vadd.f32 %v211, %v85
    %v213 = vadd.f32 %v212, %v87
    %v214 = vadd.f32 %v213, %v89
    %v215 = vadd.f32 %v214, %v91
    %v216 = vadd.f32 %v215, %v93
    %v217 = vadd.f32 %v216, %v95
    %v218 = vrot.slane %v217, 4
    %v219 = vadd.f32 %v217, %v218
    %v220 = vrot.slane %v219, 2
    %v221 = vadd.f32 %v219, %v220
    %v222 = vrot.slane %v221, 1
    %v223 = vadd.f32 %v221, %v222
    %v224 = vadd.f32 %v66, %v68
    %v225 = vadd.f32 %v224, %v70
    %v226 = vadd.f32 %v225, %v72
    %v227 = vadd.f32 %v226, %v74
    %v228 = vadd.f32 %v227, %v76
    %v229 = vadd.f32 %v228, %v78
    %v230 = vadd.f32 %v229, %v80
    %v231 = vadd.f32 %v230, %v82
    %v232 = vadd.f32 %v231, %v84
    %v233 = vadd.f32 %v232, %v86
    %v234 = vadd.f32 %v233, %v88
    %v235 = vadd.f32 %v234, %v90
    %v236 = vadd.f32 %v235, %v92
    %v237 = vadd.f32 %v236, %v94
    %v238 = vadd.f32 %v237, %v96
    %v239 = vrot.slane %v238, 4
    %v240 = vadd.f32 %v238, %v239
    %v241 = vrot.slane %v240, 2
    %v242 = vadd.f32 %v240, %v241
    %v243 = vrot.slane %v242, 1
    %v244 = vadd.f32 %v242, %v243
    %v245 = vadd.f32 %v181, %v223
    %v246 = vadd.f32 %v202, %v244
    %v247 = vadd.f32 %v97, %v99
    %v248 = vadd.f32 %v247, %v101
    %v249 = vadd.f32 %v248, %v103
    %v250 = vadd.f32 %v249, %v105
    %v251 = vadd.f32 %v250, %v107
    %v252 = vadd.f32 %v251, %v109
    %v253 = vadd.f32 %v252, %v111
    %v254 = vadd.f32 %v253, %v113
    %v255 = vadd.f32 %v254, %v115
    %v256 = vadd.f32 %v255, %v117
    %v257 = vadd.f32 %v256, %v119
    %v258 = vadd.f32 %v257, %v121
    %v259 = vadd.f32 %v258, %v123
    %v260 = vadd.f32 %v259, %v125
    %v261 = vadd.f32 %v260, %v127
    %v262 = vadd.f32 %v261, %v129
    %v263 = vadd.f32 %v262, %v131
    %v264 = vadd.f32 %v263, %v133
    %v265 = vadd.f32 %v264, %v135
    %v266 = vadd.f32 %v265, %v137
    %v267 = vadd.f32 %v266, %v139
    %v268 = vadd.f32 %v267, %v141
    %v269 = vadd.f32 %v268, %v143
    %v270 = vadd.f32 %v269, %v145
    %v271 = vadd.f32 %v270, %v147
    %v272 = vadd.f32 %v271, %v149
    %v273 = vadd.f32 %v272, %v151
    %v274 = vadd.f32 %v273, %v153
    %v275 = vadd.f32 %v274, %v155
    %v276 = vadd.f32 %v275, %v157
    %v277 = vadd.f32 %v276, %v159
    %v278 = vrot.slane %v277, 4
    %v279 = vadd.f32 %v277, %v278
    %v280 = vrot.slane %v279, 2
    %v281 = vadd.f32 %v279, %v280
    %v282 = vrot.slane %v281, 1
    %v283 = vadd.f32 %v281, %v282
    %v284 = vadd.f32 %v98, %v100
    %v285 = vadd.f32 %v284, %v102
    %v286 = vadd.f32 %v285, %v104
    %v287 = vadd.f32 %v286, %v106
    %v288 = vadd.f32 %v287, %v108
    %v289 = vadd.f32 %v288, %v110
    %v290 = vadd.f32 %v289, %v112
    %v291 = vadd.f32 %v290, %v114
    %v292 = vadd.f32 %v291, %v116
    %v293 = vadd.f32 %v292, %v118
    %v294 = vadd.f32 %v293, %v120
    %v295 = vadd.f32 %v294, %v122
    %v296 = vadd.f32 %v295, %v124
    %v297 = vadd.f32 %v296, %v126
    %v298 = vadd.f32 %v297, %v128
    %v299 = vadd.f32 %v298, %v130
    %v300 = vadd.f32 %v299, %v132
    %v301 = vadd.f32 %v300, %v134
    %v302 = vadd.f32 %v301, %v136
    %v303 = vadd.f32 %v302, %v138
    %v304 = vadd.f32 %v303, %v140
    %v305 = vadd.f32 %v304, %v142
    %v306 = vadd.f32 %v305, %v144
    %v307 = vadd.f32 %v306, %v146
    %v308 = vadd.f32 %v307, %v148
    %v309 = vadd.f32 %v308, %v150
    %v310 = vadd.f32 %v309, %v152
    %v311 = vadd.f32 %v310, %v154
    %v312 = vadd.f32 %v311, %v156
    %v313 = vadd.f32 %v312, %v158
    %v314 = vadd.f32 %v313, %v160
    %v315 = vrot.slane %v314, 4
    %v316 = vadd.f32 %v314, %v315
    %v317 = vrot.slane %v316, 2
    %v318 = vadd.f32 %v316, %v317
    %v319 = vrot.slane %v318, 1
    %v320 = vadd.f32 %v318, %v319
    %v321 = vadd.f32 %v245, %v283
    %v322 = vadd.f32 %v246, %v320
    %v323 = vmul.f32 %v33, %v33
    %v324 = vmul.f32 %v34, %v34
    %v325 = vmul.f32 %v35, %v35
    %v326 = vmul.f32 %v36, %v36
    %v327 = vmul.f32 %v37, %v37
    %v328 = vmul.f32 %v38, %v38
    %v329 = vmul.f32 %v39, %v39
    %v330 = vmul.f32 %v40, %v40
    %v331 = vmul.f32 %v41, %v41
    %v332 = vmul.f32 %v42, %v42
    %v333 = vmul.f32 %v43, %v43
    %v334 = vmul.f32 %v44, %v44
    %v335 = vmul.f32 %v45, %v45
    %v336 = vmul.f32 %v46, %v46
    %v337 = vmul.f32 %v47, %v47
    %v338 = vmul.f32 %v48, %v48
    %v339 = vmul.f32 %v49, %v49
    %v340 = vmul.f32 %v50, %v50
    %v341 = vmul.f32 %v51, %v51
    %v342 = vmul.f32 %v52, %v52
    %v343 = vmul.f32 %v53, %v53
    %v344 = vmul.f32 %v54, %v54
    %v345 = vmul.f32 %v55, %v55
    %v346 = vmul.f32 %v56, %v56
    %v347 = vmul.f32 %v57, %v57
    %v348 = vmul.f32 %v58, %v58
    %v349 = vmul.f32 %v59, %v59
    %v350 = vmul.f32 %v60, %v60
    %v351 = vmul.f32 %v61, %v61
    %v352 = vmul.f32 %v62, %v62
    %v353 = vmul.f32 %v63, %v63
    %v354 = vmul.f32 %v64, %v64
    %v355 = vadd.f32 %v323, %v325
    %v356 = vadd.f32 %v355, %v327
    %v357 = vadd.f32 %v356, %v329
    %v358 = vadd.f32 %v357, %v331
    %v359 = vadd.f32 %v358, %v333
    %v360 = vadd.f32 %v359, %v335
    %v361 = vadd.f32 %v360, %v337
    %v362 = vadd.f32 %v361, %v339
    %v363 = vadd.f32 %v362, %v341
    %v364 = vadd.f32 %v363, %v343
    %v365 = vadd.f32 %v364, %v345
    %v366 = vadd.f32 %v365, %v347
    %v367 = vadd.f32 %v366, %v349
    %v368 = vadd.f32 %v367, %v351
    %v369 = vadd.f32 %v368, %v353
    %v370 = vrot.slane %v369, 4
    %v371 = vadd.f32 %v369, %v370
    %v372 = vrot.slane %v371, 2
    %v373 = vadd.f32 %v371, %v372
    %v374 = vrot.slane %v373, 1
    %v375 = vadd.f32 %v373, %v374
    %v376 = vadd.f32 %v324, %v326
    %v377 = vadd.f32 %v376, %v328
    %v378 = vadd.f32 %v377, %v330
    %v379 = vadd.f32 %v378, %v332
    %v380 = vadd.f32 %v379, %v334
    %v381 = vadd.f32 %v380, %v336
    %v382 = vadd.f32 %v381, %v338
    %v383 = vadd.f32 %v382, %v340
    %v384 = vadd.f32 %v383, %v342
    %v385 = vadd.f32 %v384, %v344
    %v386 = vadd.f32 %v385, %v346
    %v387 = vadd.f32 %v386, %v348
    %v388 = vadd.f32 %v387, %v350
    %v389 = vadd.f32 %v388, %v352
    %v390 = vadd.f32 %v389, %v354
    %v391 = vrot.slane %v390, 4
    %v392 = vadd.f32 %v390, %v391
    %v393 = vrot.slane %v392, 2
    %v394 = vadd.f32 %v392, %v393
    %v395 = vrot.slane %v394, 1
    %v396 = vadd.f32 %v394, %v395
    %v397 = vmul.f32 %v65, %v65
    %v398 = vmul.f32 %v66, %v66
    %v399 = vmul.f32 %v67, %v67
    %v400 = vmul.f32 %v68, %v68
    %v401 = vmul.f32 %v69, %v69
    %v402 = vmul.f32 %v70, %v70
    %v403 = vmul.f32 %v71, %v71
    %v404 = vmul.f32 %v72, %v72
    %v405 = vmul.f32 %v73, %v73
    %v406 = vmul.f32 %v74, %v74
    %v407 = vmul.f32 %v75, %v75
    %v408 = vmul.f32 %v76, %v76
    %v409 = vmul.f32 %v77, %v77
    %v410 = vmul.f32 %v78, %v78
    %v411 = vmul.f32 %v79, %v79
    %v412 = vmul.f32 %v80, %v80
    %v413 = vmul.f32 %v81, %v81
    %v414 = vmul.f32 %v82, %v82
    %v415 = vmul.f32 %v83, %v83
    %v416 = vmul.f32 %v84, %v84
    %v417 = vmul.f32 %v85, %v85
    %v418 = vmul.f32 %v86, %v86
    %v419 = vmul.f32 %v87, %v87
    %v420 = vmul.f32 %v88, %v88
    %v421 = vmul.f32 %v89, %v89
    %v422 = vmul.f32 %v90, %v90
    %v423 = vmul.f32 %v91, %v91
    %v424 = vmul.f32 %v92, %v92
    %v425 = vmul.f32 %v93, %v93
    %v426 = vmul.f32 %v94, %v94
    %v427 = vmul.f32 %v95, %v95
    %v428 = vmul.f32 %v96, %v96
    %v429 = vadd.f32 %v397, %v399
    %v430 = vadd.f32 %v429, %v401
    %v431 = vadd.f32 %v430, %v403
    %v432 = vadd.f32 %v431, %v405
    %v433 = vadd.f32 %v432, %v407
    %v434 = vadd.f32 %v433, %v409
    %v435 = vadd.f32 %v434, %v411
    %v436 = vadd.f32 %v435, %v413
    %v437 = vadd.f32 %v436, %v415
    %v438 = vadd.f32 %v437, %v417
    %v439 = vadd.f32 %v438, %v419
    %v440 = vadd.f32 %v439, %v421
    %v441 = vadd.f32 %v440, %v423
    %v442 = vadd.f32 %v441, %v425
    %v443 = vadd.f32 %v442, %v427
    %v444 = vrot.slane %v443, 4
    %v445 = vadd.f32 %v443, %v444
    %v446 = vrot.slane %v445, 2
    %v447 = vadd.f32 %v445, %v446
    %v448 = vrot.slane %v447, 1
    %v449 = vadd.f32 %v447, %v448
    %v450 = vadd.f32 %v398, %v400
    %v451 = vadd.f32 %v450, %v402
    %v452 = vadd.f32 %v451, %v404
    %v453 = vadd.f32 %v452, %v406
    %v454 = vadd.f32 %v453, %v408
    %v455 = vadd.f32 %v454, %v410
    %v456 = vadd.f32 %v455, %v412
    %v457 = vadd.f32 %v456, %v414
    %v458 = vadd.f32 %v457, %v416
    %v459 = vadd.f32 %v458, %v418
    %v460 = vadd.f32 %v459, %v420
    %v461 = vadd.f32 %v460, %v422
    %v462 = vadd.f32 %v461, %v424
    %v463 = vadd.f32 %v462, %v426
    %v464 = vadd.f32 %v463, %v428
    %v465 = vrot.slane %v464, 4
    %v466 = vadd.f32 %v464, %v465
    %v467 = vrot.slane %v466, 2
    %v468 = vadd.f32 %v466, %v467
    %v469 = vrot.slane %v468, 1
    %v470 = vadd.f32 %v468, %v469
    %v471 = vadd.f32 %v375, %v449
    %v472 = vadd.f32 %v396, %v470
    %v473 = vmul.f32 %v97, %v97
    %v474 = vmul.f32 %v98, %v98
    %v475 = vmul.f32 %v99, %v99
    %v476 = vmul.f32 %v100, %v100
    %v477 = vmul.f32 %v101, %v101
    %v478 = vmul.f32 %v102, %v102
    %v479 = vmul.f32 %v103, %v103
    %v480 = vmul.f32 %v104, %v104
    %v481 = vmul.f32 %v105, %v105
    %v482 = vmul.f32 %v106, %v106
    %v483 = vmul.f32 %v107, %v107
    %v484 = vmul.f32 %v108, %v108
    %v485 = vmul.f32 %v109, %v109
    %v486 = vmul.f32 %v110, %v110
    %v487 = vmul.f32 %v111, %v111
    %v488 = vmul.f32 %v112, %v112
    %v489 = vmul.f32 %v113, %v113
    %v490 = vmul.f32 %v114, %v114
    %v491 = vmul.f32 %v115, %v115
    %v492 = vmul.f32 %v116, %v116
    %v493 = vmul.f32 %v117, %v117
    %v494 = vmul.f32 %v118, %v118
    %v495 = vmul.f32 %v119, %v119
    %v496 = vmul.f32 %v120, %v120
    %v497 = vmul.f32 %v121, %v121
    %v498 = vmul.f32 %v122, %v122
    %v499 = vmul.f32 %v123, %v123
    %v500 = vmul.f32 %v124, %v124
    %v501 = vmul.f32 %v125, %v125
    %v502 = vmul.f32 %v126, %v126
    %v503 = vmul.f32 %v127, %v127
    %v504 = vmul.f32 %v128, %v128
    %v505 = vmul.f32 %v129, %v129
    %v506 = vmul.f32 %v130, %v130
    %v507 = vmul.f32 %v131, %v131
    %v508 = vmul.f32 %v132, %v132
    %v509 = vmul.f32 %v133, %v133
    %v510 = vmul.f32 %v134, %v134
    %v511 = vmul.f32 %v135, %v135
    %v512 = vmul.f32 %v136, %v136
    %v513 = vmul.f32 %v137, %v137
    %v514 = vmul.f32 %v138, %v138
    %v515 = vmul.f32 %v139, %v139
    %v516 = vmul.f32 %v140, %v140
    %v517 = vmul.f32 %v141, %v141
    %v518 = vmul.f32 %v142, %v142
    %v519 = vmul.f32 %v143, %v143
    %v520 = vmul.f32 %v144, %v144
    %v521 = vmul.f32 %v145, %v145
    %v522 = vmul.f32 %v146, %v146
    %v523 = vmul.f32 %v147, %v147
    %v524 = vmul.f32 %v148, %v148
    %v525 = vmul.f32 %v149, %v149
    %v526 = vmul.f32 %v150, %v150
    %v527 = vmul.f32 %v151, %v151
    %v528 = vmul.f32 %v152, %v152
    %v529 = vmul.f32 %v153, %v153
    %v530 = vmul.f32 %v154, %v154
    %v531 = vmul.f32 %v155, %v155
    %v532 = vmul.f32 %v156, %v156
    %v533 = vmul.f32 %v157, %v157
    %v534 = vmul.f32 %v158, %v158
    %v535 = vmul.f32 %v159, %v159
    %v536 = vmul.f32 %v160, %v160
    %v537 = vadd.f32 %v473, %v475
    %v538 = vadd.f32 %v537, %v477
    %v539 = vadd.f32 %v538, %v479
    %v540 = vadd.f32 %v539, %v481
    %v541 = vadd.f32 %v540, %v483
    %v542 = vadd.f32 %v541, %v485
    %v543 = vadd.f32 %v542, %v487
    %v544 = vadd.f32 %v543, %v489
    %v545 = vadd.f32 %v544, %v491
    %v546 = vadd.f32 %v545, %v493
    %v547 = vadd.f32 %v546, %v495
    %v548 = vadd.f32 %v547, %v497
    %v549 = vadd.f32 %v548, %v499
    %v550 = vadd.f32 %v549, %v501
    %v551 = vadd.f32 %v550, %v503
    %v552 = vadd.f32 %v551, %v505
    %v553 = vadd.f32 %v552, %v507
    %v554 = vadd.f32 %v553, %v509
    %v555 = vadd.f32 %v554, %v511
    %v556 = vadd.f32 %v555, %v513
    %v557 = vadd.f32 %v556, %v515
    %v558 = vadd.f32 %v557, %v517
    %v559 = vadd.f32 %v558, %v519
    %v560 = vadd.f32 %v559, %v521
    %v561 = vadd.f32 %v560, %v523
    %v562 = vadd.f32 %v561, %v525
    %v563 = vadd.f32 %v562, %v527
    %v564 = vadd.f32 %v563, %v529
    %v565 = vadd.f32 %v564, %v531
    %v566 = vadd.f32 %v565, %v533
    %v567 = vadd.f32 %v566, %v535
    %v568 = vrot.slane %v567, 4
    %v569 = vadd.f32 %v567, %v568
    %v570 = vrot.slane %v569, 2
    %v571 = vadd.f32 %v569, %v570
    %v572 = vrot.slane %v571, 1
    %v573 = vadd.f32 %v571, %v572
    %v574 = vadd.f32 %v474, %v476
    %v575 = vadd.f32 %v574, %v478
    %v576 = vadd.f32 %v575, %v480
    %v577 = vadd.f32 %v576, %v482
    %v578 = vadd.f32 %v577, %v484
    %v579 = vadd.f32 %v578, %v486
    %v580 = vadd.f32 %v579, %v488
    %v581 = vadd.f32 %v580, %v490
    %v582 = vadd.f32 %v581, %v492
    %v583 = vadd.f32 %v582, %v494
    %v584 = vadd.f32 %v583, %v496
    %v585 = vadd.f32 %v584, %v498
    %v586 = vadd.f32 %v585, %v500
    %v587 = vadd.f32 %v586, %v502
    %v588 = vadd.f32 %v587, %v504
    %v589 = vadd.f32 %v588, %v506
    %v590 = vadd.f32 %v589, %v508
    %v591 = vadd.f32 %v590, %v510
    %v592 = vadd.f32 %v591, %v512
    %v593 = vadd.f32 %v592, %v514
    %v594 = vadd.f32 %v593, %v516
    %v595 = vadd.f32 %v594, %v518
    %v596 = vadd.f32 %v595, %v520
    %v597 = vadd.f32 %v596, %v522
    %v598 = vadd.f32 %v597, %v524
    %v599 = vadd.f32 %v598, %v526
    %v600 = vadd.f32 %v599, %v528
    %v601 = vadd.f32 %v600, %v530
    %v602 = vadd.f32 %v601, %v532
    %v603 = vadd.f32 %v602, %v534
    %v604 = vadd.f32 %v603, %v536
    %v605 = vrot.slane %v604, 4
    %v606 = vadd.f32 %v604, %v605
    %v607 = vrot.slane %v606, 2
    %v608 = vadd.f32 %v606, %v607
    %v609 = vrot.slane %v608, 1
    %v610 = vadd.f32 %v608, %v609
    %v611 = vadd.f32 %v471, %v573
    %v612 = vadd.f32 %v472, %v610
    %v613 = vrcp.pop 512.0
    %v614 = vmul.f32 %v321, %v613
    %v615 = vmul.f32 %v322, %v613
    %v616 = vmul.f32 %v611, %v613
    %v617 = vmul.f32 %v612, %v613
    %v618 = vmul.f32 %v614, %v614
    %v619 = vmul.f32 %v615, %v615
    %v620 = vsub.f32 %v616, %v618
    %v621 = vsub.f32 %v617, %v619
    %v622 = vmax.f32 %v620, 0.0
    %v623 = vmax.f32 %v621, 0.0
    %v624 = vadd.f32 %v622, 1e-05
    %v625 = vadd.f32 %v623, 1e-05
    %v626 = vrsqrt.pop %v624
    %v627 = vrsqrt.pop %v625
    %v628 = vld [vmem:[%s4] sm:$0x3]
    %v630 = vlaneseq
    %v631 = vshrl.u32 %v630, 7
    %v632 = vsub.s32 0, %v631
    %v633 = vrot.slane %v628, %v632
    %v634 = vlaneseq
    %v635 = vshrl.u32 %v634, 7
    %v636 = vsub.s32 1, %v635
    %v637 = vrot.slane %v628, %v636
    %v640 = vmul.f32 %v626, %v633
    %v641 = vmul.f32 %v627, %v637
    %v642 = vld [vmem:[%s5] sm:$0x3]
    %v643 = vmul.f32 %v614, %v640
    %v644 = vmul.f32 %v615, %v641
    %v647 = vcombine.low %v643, %v644
    %v649 = vunpack.c.l.s4 1966171168
    %v650 = vunpack.c.0.s8 %v649
    %v651 = vlaneseq
    %v652 = vshrl.u32 %v651, 7
    %v653 = vsub.s32 %v650, %v652
    %v654 = vrot.slane %v647, %v653
    %v656 = vunpack.c.l.s4 1966171168
    %v657 = vunpack.c.0.s8 %v656
    %v658 = vlaneseq
    %v659 = vshrl.u32 %v658, 7
    %v660 = vsub.s32 %v657, %v659
    %v661 = vrot.slane %v654, %v660
    %v663 = vsub.f32 %v642, %v661
    %v664 = vld [vmem:[%s3] sm:$0xff]
    %v665 = vld [vmem:[%s3 + $0x8] sm:$0xff]
    %v666 = vld [vmem:[%s3 + $0x10] sm:$0xff]
    %v667 = vld [vmem:[%s3 + $0x18] sm:$0xff]
    %v668 = vld [vmem:[%s3 + $0x20] sm:$0xff]
    %v669 = vld [vmem:[%s3 + $0x28] sm:$0xff]
    %v670 = vld [vmem:[%s3 + $0x30] sm:$0xff]
    %v671 = vld [vmem:[%s3 + $0x38] sm:$0xff]
    %v672 = vld [vmem:[%s3 + $0x40] sm:$0xff]
    %v673 = vld [vmem:[%s3 + $0x48] sm:$0xff]
    %v674 = vld [vmem:[%s3 + $0x50] sm:$0xff]
    %v675 = vld [vmem:[%s3 + $0x58] sm:$0xff]
    %v676 = vld [vmem:[%s3 + $0x60] sm:$0xff]
    %v677 = vld [vmem:[%s3 + $0x68] sm:$0xff]
    %v678 = vld [vmem:[%s3 + $0x70] sm:$0xff]
    %v679 = vld [vmem:[%s3 + $0x78] sm:$0xff]
    %v680 = vld [vmem:[%s3 + $0x80] sm:$0xff]
    %v681 = vld [vmem:[%s3 + $0x88] sm:$0xff]
    %v682 = vld [vmem:[%s3 + $0x90] sm:$0xff]
    %v683 = vld [vmem:[%s3 + $0x98] sm:$0xff]
    %v684 = vld [vmem:[%s3 + $0xa0] sm:$0xff]
    %v685 = vld [vmem:[%s3 + $0xa8] sm:$0xff]
    %v686 = vld [vmem:[%s3 + $0xb0] sm:$0xff]
    %v687 = vld [vmem:[%s3 + $0xb8] sm:$0xff]
    %v688 = vld [vmem:[%s3 + $0xc0] sm:$0xff]
    %v689 = vld [vmem:[%s3 + $0xc8] sm:$0xff]
    %v690 = vld [vmem:[%s3 + $0xd0] sm:$0xff]
    %v691 = vld [vmem:[%s3 + $0xd8] sm:$0xff]
    %v692 = vld [vmem:[%s3 + $0xe0] sm:$0xff]
    %v693 = vld [vmem:[%s3 + $0xe8] sm:$0xff]
    %v694 = vld [vmem:[%s3 + $0xf0] sm:$0xff]
    %v695 = vld [vmem:[%s3 + $0xf8] sm:$0xff]
    %v696 = vlaneseq
    %v697 = vshrl.u32 %v696, 7
    %v698 = vsub.s32 0, %v697
    %v699 = vrot.slane %v640, %v698
    %v700 = vlaneseq
    %v701 = vshrl.u32 %v700, 7
    %v702 = vsub.s32 0, %v701
    %v703 = vrot.slane %v641, %v702
    %v704 = vmul.f32 %v33, %v699
    %v705 = vmul.f32 %v34, %v703
    %v706 = vmul.f32 %v35, %v699
    %v707 = vmul.f32 %v36, %v703
    %v708 = vmul.f32 %v37, %v699
    %v709 = vmul.f32 %v38, %v703
    %v710 = vmul.f32 %v39, %v699
    %v711 = vmul.f32 %v40, %v703
    %v712 = vmul.f32 %v41, %v699
    %v713 = vmul.f32 %v42, %v703
    %v714 = vmul.f32 %v43, %v699
    %v715 = vmul.f32 %v44, %v703
    %v716 = vmul.f32 %v45, %v699
    %v717 = vmul.f32 %v46, %v703
    %v718 = vmul.f32 %v47, %v699
    %v719 = vmul.f32 %v48, %v703
    %v720 = vmul.f32 %v49, %v699
    %v721 = vmul.f32 %v50, %v703
    %v722 = vmul.f32 %v51, %v699
    %v723 = vmul.f32 %v52, %v703
    %v724 = vmul.f32 %v53, %v699
    %v725 = vmul.f32 %v54, %v703
    %v726 = vmul.f32 %v55, %v699
    %v727 = vmul.f32 %v56, %v703
    %v728 = vmul.f32 %v57, %v699
    %v729 = vmul.f32 %v58, %v703
    %v730 = vmul.f32 %v59, %v699
    %v731 = vmul.f32 %v60, %v703
    %v732 = vmul.f32 %v61, %v699
    %v733 = vmul.f32 %v62, %v703
    %v734 = vmul.f32 %v63, %v699
    %v735 = vmul.f32 %v64, %v703
    %v736 = vadd.f32 %v664, %v704
    %v737 = vadd.f32 %v665, %v705
    %v738 = vadd.f32 %v666, %v706
    %v739 = vadd.f32 %v667, %v707
    %v740 = vadd.f32 %v668, %v708
    %v741 = vadd.f32 %v669, %v709
    %v742 = vadd.f32 %v670, %v710
    %v743 = vadd.f32 %v671, %v711
    %v744 = vadd.f32 %v672, %v712
    %v745 = vadd.f32 %v673, %v713
    %v746 = vadd.f32 %v674, %v714
    %v747 = vadd.f32 %v675, %v715
    %v748 = vadd.f32 %v676, %v716
    %v749 = vadd.f32 %v677, %v717
    %v750 = vadd.f32 %v678, %v718
    %v751 = vadd.f32 %v679, %v719
    %v752 = vadd.f32 %v680, %v720
    %v753 = vadd.f32 %v681, %v721
    %v754 = vadd.f32 %v682, %v722
    %v755 = vadd.f32 %v683, %v723
    %v756 = vadd.f32 %v684, %v724
    %v757 = vadd.f32 %v685, %v725
    %v758 = vadd.f32 %v686, %v726
    %v759 = vadd.f32 %v687, %v727
    %v760 = vadd.f32 %v688, %v728
    %v761 = vadd.f32 %v689, %v729
    %v762 = vadd.f32 %v690, %v730
    %v763 = vadd.f32 %v691, %v731
    %v764 = vadd.f32 %v692, %v732
    %v765 = vadd.f32 %v693, %v733
    %v766 = vadd.f32 %v694, %v734
    %v767 = vadd.f32 %v695, %v735
    %v769 = vlaneseq
    %v770 = vshrl.u32 %v769, 7
    %v771 = vsub.s32 0, %v770
    %v772 = vrot.slane %v663, %v771
    %v773 = vlaneseq
    %v774 = vshrl.u32 %v773, 7
    %v775 = vsub.s32 1, %v774
    %v776 = vrot.slane %v663, %v775
    %v779 = vadd.f32 %v736, %v772
    %v780 = vadd.f32 %v737, %v776
    %v781 = vadd.f32 %v738, %v772
    %v782 = vadd.f32 %v739, %v776
    %v783 = vadd.f32 %v740, %v772
    %v784 = vadd.f32 %v741, %v776
    %v785 = vadd.f32 %v742, %v772
    %v786 = vadd.f32 %v743, %v776
    %v787 = vadd.f32 %v744, %v772
    %v788 = vadd.f32 %v745, %v776
    %v789 = vadd.f32 %v746, %v772
    %v790 = vadd.f32 %v747, %v776
    %v791 = vadd.f32 %v748, %v772
    %v792 = vadd.f32 %v749, %v776
    %v793 = vadd.f32 %v750, %v772
    %v794 = vadd.f32 %v751, %v776
    %v795 = vadd.f32 %v752, %v772
    %v796 = vadd.f32 %v753, %v776
    %v797 = vadd.f32 %v754, %v772
    %v798 = vadd.f32 %v755, %v776
    %v799 = vadd.f32 %v756, %v772
    %v800 = vadd.f32 %v757, %v776
    %v801 = vadd.f32 %v758, %v772
    %v802 = vadd.f32 %v759, %v776
    %v803 = vadd.f32 %v760, %v772
    %v804 = vadd.f32 %v761, %v776
    %v805 = vadd.f32 %v762, %v772
    %v806 = vadd.f32 %v763, %v776
    %v807 = vadd.f32 %v764, %v772
    %v808 = vadd.f32 %v765, %v776
    %v809 = vadd.f32 %v766, %v772
    %v810 = vadd.f32 %v767, %v776
    %v811 = vmax.f32 %v779, 0.0
    %v812 = vmax.f32 %v780, 0.0
    %v813 = vmax.f32 %v781, 0.0
    %v814 = vmax.f32 %v782, 0.0
    %v815 = vmax.f32 %v783, 0.0
    %v816 = vmax.f32 %v784, 0.0
    %v817 = vmax.f32 %v785, 0.0
    %v818 = vmax.f32 %v786, 0.0
    %v819 = vmax.f32 %v787, 0.0
    %v820 = vmax.f32 %v788, 0.0
    %v821 = vmax.f32 %v789, 0.0
    %v822 = vmax.f32 %v790, 0.0
    %v823 = vmax.f32 %v791, 0.0
    %v824 = vmax.f32 %v792, 0.0
    %v825 = vmax.f32 %v793, 0.0
    %v826 = vmax.f32 %v794, 0.0
    %v827 = vmax.f32 %v795, 0.0
    %v828 = vmax.f32 %v796, 0.0
    %v829 = vmax.f32 %v797, 0.0
    %v830 = vmax.f32 %v798, 0.0
    %v831 = vmax.f32 %v799, 0.0
    %v832 = vmax.f32 %v800, 0.0
    %v833 = vmax.f32 %v801, 0.0
    %v834 = vmax.f32 %v802, 0.0
    %v835 = vmax.f32 %v803, 0.0
    %v836 = vmax.f32 %v804, 0.0
    %v837 = vmax.f32 %v805, 0.0
    %v838 = vmax.f32 %v806, 0.0
    %v839 = vmax.f32 %v807, 0.0
    %v840 = vmax.f32 %v808, 0.0
    %v841 = vmax.f32 %v809, 0.0
    %v842 = vmax.f32 %v810, 0.0
    %v843 = vpack.c.bf16 %v813, %v811
    %v844 = vpack.c.bf16 %v814, %v812
    %v845 = vpack.c.bf16 %v817, %v815
    %v846 = vpack.c.bf16 %v818, %v816
    %v847 = vpack.c.bf16 %v821, %v819
    %v848 = vpack.c.bf16 %v822, %v820
    %v849 = vpack.c.bf16 %v825, %v823
    %v850 = vpack.c.bf16 %v826, %v824
    %v851 = vpack.c.bf16 %v829, %v827
    %v852 = vpack.c.bf16 %v830, %v828
    %v853 = vpack.c.bf16 %v833, %v831
    %v854 = vpack.c.bf16 %v834, %v832
    %v855 = vpack.c.bf16 %v837, %v835
    %v856 = vpack.c.bf16 %v838, %v836
    %v857 = vpack.c.bf16 %v841, %v839
    %v858 = vpack.c.bf16 %v842, %v840
    %v859 = vld [vmem:[%s6] sm:$0xff]
    %v860 = vld [vmem:[%s6 + $0x8] sm:$0xff]
    %v861 = vld [vmem:[%s6 + $0x10] sm:$0xff]
    %v862 = vld [vmem:[%s6 + $0x18] sm:$0xff]
    %v863 = vld [vmem:[%s6 + $0x20] sm:$0xff]
    %v864 = vld [vmem:[%s6 + $0x28] sm:$0xff]
    %v865 = vld [vmem:[%s6 + $0x30] sm:$0xff]
    %v866 = vld [vmem:[%s6 + $0x38] sm:$0xff]
    %v867 = vld [vmem:[%s6 + $0x40] sm:$0xff]
    %v868 = vld [vmem:[%s6 + $0x48] sm:$0xff]
    %v869 = vld [vmem:[%s6 + $0x50] sm:$0xff]
    %v870 = vld [vmem:[%s6 + $0x58] sm:$0xff]
    %v871 = vld [vmem:[%s6 + $0x60] sm:$0xff]
    %v872 = vld [vmem:[%s6 + $0x68] sm:$0xff]
    %v873 = vld [vmem:[%s6 + $0x70] sm:$0xff]
    %v874 = vld [vmem:[%s6 + $0x78] sm:$0xff]
    %v875 = vld [vmem:[%s6 + $0x80] sm:$0xff]
    %v876 = vld [vmem:[%s6 + $0x88] sm:$0xff]
    %v877 = vld [vmem:[%s6 + $0x90] sm:$0xff]
    %v878 = vld [vmem:[%s6 + $0x98] sm:$0xff]
    %v879 = vld [vmem:[%s6 + $0xa0] sm:$0xff]
    %v880 = vld [vmem:[%s6 + $0xa8] sm:$0xff]
    %v881 = vld [vmem:[%s6 + $0xb0] sm:$0xff]
    %v882 = vld [vmem:[%s6 + $0xb8] sm:$0xff]
    %v883 = vld [vmem:[%s6 + $0xc0] sm:$0xff]
    %v884 = vld [vmem:[%s6 + $0xc8] sm:$0xff]
    %v885 = vld [vmem:[%s6 + $0xd0] sm:$0xff]
    %v886 = vld [vmem:[%s6 + $0xd8] sm:$0xff]
    %v887 = vld [vmem:[%s6 + $0xe0] sm:$0xff]
    %v888 = vld [vmem:[%s6 + $0xe8] sm:$0xff]
    %v889 = vld [vmem:[%s6 + $0xf0] sm:$0xff]
    %v890 = vld [vmem:[%s6 + $0xf8] sm:$0xff]
    %v891 = vld [vmem:[%s6 + $0x100] sm:$0xff]
    %v892 = vld [vmem:[%s6 + $0x108] sm:$0xff]
    %v893 = vld [vmem:[%s6 + $0x110] sm:$0xff]
    %v894 = vld [vmem:[%s6 + $0x118] sm:$0xff]
    %v895 = vld [vmem:[%s6 + $0x120] sm:$0xff]
    %v896 = vld [vmem:[%s6 + $0x128] sm:$0xff]
    %v897 = vld [vmem:[%s6 + $0x130] sm:$0xff]
    %v898 = vld [vmem:[%s6 + $0x138] sm:$0xff]
    %v899 = vld [vmem:[%s6 + $0x140] sm:$0xff]
    %v900 = vld [vmem:[%s6 + $0x148] sm:$0xff]
    %v901 = vld [vmem:[%s6 + $0x150] sm:$0xff]
    %v902 = vld [vmem:[%s6 + $0x158] sm:$0xff]
    %v903 = vld [vmem:[%s6 + $0x160] sm:$0xff]
    %v904 = vld [vmem:[%s6 + $0x168] sm:$0xff]
    %v905 = vld [vmem:[%s6 + $0x170] sm:$0xff]
    %v906 = vld [vmem:[%s6 + $0x178] sm:$0xff]
    %v907 = vld [vmem:[%s6 + $0x180] sm:$0xff]
    %v908 = vld [vmem:[%s6 + $0x188] sm:$0xff]
    %v909 = vld [vmem:[%s6 + $0x190] sm:$0xff]
    %v910 = vld [vmem:[%s6 + $0x198] sm:$0xff]
    %v911 = vld [vmem:[%s6 + $0x1a0] sm:$0xff]
    %v912 = vld [vmem:[%s6 + $0x1a8] sm:$0xff]
    %v913 = vld [vmem:[%s6 + $0x1b0] sm:$0xff]
    %v914 = vld [vmem:[%s6 + $0x1b8] sm:$0xff]
    %v915 = vld [vmem:[%s6 + $0x1c0] sm:$0xff]
    %v916 = vld [vmem:[%s6 + $0x1c8] sm:$0xff]
    %v917 = vld [vmem:[%s6 + $0x1d0] sm:$0xff]
    %v918 = vld [vmem:[%s6 + $0x1d8] sm:$0xff]
    %v919 = vld [vmem:[%s6 + $0x1e0] sm:$0xff]
    %v920 = vld [vmem:[%s6 + $0x1e8] sm:$0xff]
    %v921 = vld [vmem:[%s6 + $0x1f0] sm:$0xff]
    %v922 = vld [vmem:[%s6 + $0x1f8] sm:$0xff]
    %v987 = vunpack.c.l.b16 %v859
    %v988 = vunpack.c.h.b16 %v859
    %v989 = vunpack.c.l.b16 %v860
    %v990 = vunpack.c.h.b16 %v860
    %v991 = vunpack.c.l.b16 %v861
    %v992 = vunpack.c.h.b16 %v861
    %v993 = vunpack.c.l.b16 %v862
    %v994 = vunpack.c.h.b16 %v862
    %v995 = vunpack.c.l.b16 %v863
    %v996 = vunpack.c.h.b16 %v863
    %v997 = vunpack.c.l.b16 %v864
    %v998 = vunpack.c.h.b16 %v864
    %v999 = vunpack.c.l.b16 %v865
    %v1000 = vunpack.c.h.b16 %v865
    %v1001 = vunpack.c.l.b16 %v866
    %v1002 = vunpack.c.h.b16 %v866
    %v1003 = vunpack.c.l.b16 %v867
    %v1004 = vunpack.c.h.b16 %v867
    %v1005 = vunpack.c.l.b16 %v868
    %v1006 = vunpack.c.h.b16 %v868
    %v1007 = vunpack.c.l.b16 %v869
    %v1008 = vunpack.c.h.b16 %v869
    %v1009 = vunpack.c.l.b16 %v870
    %v1010 = vunpack.c.h.b16 %v870
    %v1011 = vunpack.c.l.b16 %v871
    %v1012 = vunpack.c.h.b16 %v871
    %v1013 = vunpack.c.l.b16 %v872
    %v1014 = vunpack.c.h.b16 %v872
    %v1015 = vunpack.c.l.b16 %v873
    %v1016 = vunpack.c.h.b16 %v873
    %v1017 = vunpack.c.l.b16 %v874
    %v1018 = vunpack.c.h.b16 %v874
    %v1019 = vunpack.c.l.b16 %v875
    %v1020 = vunpack.c.h.b16 %v875
    %v1021 = vunpack.c.l.b16 %v876
    %v1022 = vunpack.c.h.b16 %v876
    %v1023 = vunpack.c.l.b16 %v877
    %v1024 = vunpack.c.h.b16 %v877
    %v1025 = vunpack.c.l.b16 %v878
    %v1026 = vunpack.c.h.b16 %v878
    %v1027 = vunpack.c.l.b16 %v879
    %v1028 = vunpack.c.h.b16 %v879
    %v1029 = vunpack.c.l.b16 %v880
    %v1030 = vunpack.c.h.b16 %v880
    %v1031 = vunpack.c.l.b16 %v881
    %v1032 = vunpack.c.h.b16 %v881
    %v1033 = vunpack.c.l.b16 %v882
    %v1034 = vunpack.c.h.b16 %v882
    %v1035 = vunpack.c.l.b16 %v883
    %v1036 = vunpack.c.h.b16 %v883
    %v1037 = vunpack.c.l.b16 %v884
    %v1038 = vunpack.c.h.b16 %v884
    %v1039 = vunpack.c.l.b16 %v885
    %v1040 = vunpack.c.h.b16 %v885
    %v1041 = vunpack.c.l.b16 %v886
    %v1042 = vunpack.c.h.b16 %v886
    %v1043 = vunpack.c.l.b16 %v887
    %v1044 = vunpack.c.h.b16 %v887
    %v1045 = vunpack.c.l.b16 %v888
    %v1046 = vunpack.c.h.b16 %v888
    %v1047 = vunpack.c.l.b16 %v889
    %v1048 = vunpack.c.h.b16 %v889
    %v1049 = vunpack.c.l.b16 %v890
    %v1050 = vunpack.c.h.b16 %v890
    %v1051 = vunpack.c.l.b16 %v891
    %v1052 = vunpack.c.h.b16 %v891
    %v1053 = vunpack.c.l.b16 %v892
    %v1054 = vunpack.c.h.b16 %v892
    %v1055 = vunpack.c.l.b16 %v893
    %v1056 = vunpack.c.h.b16 %v893
    %v1057 = vunpack.c.l.b16 %v894
    %v1058 = vunpack.c.h.b16 %v894
    %v1059 = vunpack.c.l.b16 %v895
    %v1060 = vunpack.c.h.b16 %v895
    %v1061 = vunpack.c.l.b16 %v896
    %v1062 = vunpack.c.h.b16 %v896
    %v1063 = vunpack.c.l.b16 %v897
    %v1064 = vunpack.c.h.b16 %v897
    %v1065 = vunpack.c.l.b16 %v898
    %v1066 = vunpack.c.h.b16 %v898
    %v1067 = vunpack.c.l.b16 %v899
    %v1068 = vunpack.c.h.b16 %v899
    %v1069 = vunpack.c.l.b16 %v900
    %v1070 = vunpack.c.h.b16 %v900
    %v1071 = vunpack.c.l.b16 %v901
    %v1072 = vunpack.c.h.b16 %v901
    %v1073 = vunpack.c.l.b16 %v902
    %v1074 = vunpack.c.h.b16 %v902
    %v1075 = vunpack.c.l.b16 %v903
    %v1076 = vunpack.c.h.b16 %v903
    %v1077 = vunpack.c.l.b16 %v904
    %v1078 = vunpack.c.h.b16 %v904
    %v1079 = vunpack.c.l.b16 %v905
    %v1080 = vunpack.c.h.b16 %v905
    %v1081 = vunpack.c.l.b16 %v906
    %v1082 = vunpack.c.h.b16 %v906
    %v1083 = vunpack.c.l.b16 %v907
    %v1084 = vunpack.c.h.b16 %v907
    %v1085 = vunpack.c.l.b16 %v908
    %v1086 = vunpack.c.h.b16 %v908
    %v1087 = vunpack.c.l.b16 %v909
    %v1088 = vunpack.c.h.b16 %v909
    %v1089 = vunpack.c.l.b16 %v910
    %v1090 = vunpack.c.h.b16 %v910
    %v1091 = vunpack.c.l.b16 %v911
    %v1092 = vunpack.c.h.b16 %v911
    %v1093 = vunpack.c.l.b16 %v912
    %v1094 = vunpack.c.h.b16 %v912
    %v1095 = vunpack.c.l.b16 %v913
    %v1096 = vunpack.c.h.b16 %v913
    %v1097 = vunpack.c.l.b16 %v914
    %v1098 = vunpack.c.h.b16 %v914
    %v1099 = vunpack.c.l.b16 %v915
    %v1100 = vunpack.c.h.b16 %v915
    %v1101 = vunpack.c.l.b16 %v916
    %v1102 = vunpack.c.h.b16 %v916
    %v1103 = vunpack.c.l.b16 %v917
    %v1104 = vunpack.c.h.b16 %v917
    %v1105 = vunpack.c.l.b16 %v918
    %v1106 = vunpack.c.h.b16 %v918
    %v1107 = vunpack.c.l.b16 %v919
    %v1108 = vunpack.c.h.b16 %v919
    %v1109 = vunpack.c.l.b16 %v920
    %v1110 = vunpack.c.h.b16 %v920
    %v1111 = vunpack.c.l.b16 %v921
    %v1112 = vunpack.c.h.b16 %v921
    %v1113 = vunpack.c.l.b16 %v922
    %v1114 = vunpack.c.h.b16 %v922
    %v1115 = vpack.c.b16 %v991, %v987
    %v1116 = vpack.c.b16 %v992, %v988
    %v1117 = vpack.c.b16 %v993, %v989
    %v1118 = vpack.c.b16 %v994, %v990
    %v1119 = vpack.c.b16 %v999, %v995
    %v1120 = vpack.c.b16 %v1000, %v996
    %v1121 = vpack.c.b16 %v1001, %v997
    %v1122 = vpack.c.b16 %v1002, %v998
    %v1123 = vpack.c.b16 %v1007, %v1003
    %v1124 = vpack.c.b16 %v1008, %v1004
    %v1125 = vpack.c.b16 %v1009, %v1005
    %v1126 = vpack.c.b16 %v1010, %v1006
    %v1127 = vpack.c.b16 %v1015, %v1011
    %v1128 = vpack.c.b16 %v1016, %v1012
    %v1129 = vpack.c.b16 %v1017, %v1013
    %v1130 = vpack.c.b16 %v1018, %v1014
    %v1131 = vpack.c.b16 %v1023, %v1019
    %v1132 = vpack.c.b16 %v1024, %v1020
    %v1133 = vpack.c.b16 %v1025, %v1021
    %v1134 = vpack.c.b16 %v1026, %v1022
    %v1135 = vpack.c.b16 %v1031, %v1027
    %v1136 = vpack.c.b16 %v1032, %v1028
    %v1137 = vpack.c.b16 %v1033, %v1029
    %v1138 = vpack.c.b16 %v1034, %v1030
    %v1139 = vpack.c.b16 %v1039, %v1035
    %v1140 = vpack.c.b16 %v1040, %v1036
    %v1141 = vpack.c.b16 %v1041, %v1037
    %v1142 = vpack.c.b16 %v1042, %v1038
    %v1143 = vpack.c.b16 %v1047, %v1043
    %v1144 = vpack.c.b16 %v1048, %v1044
    %v1145 = vpack.c.b16 %v1049, %v1045
    %v1146 = vpack.c.b16 %v1050, %v1046
    %v1147 = vpack.c.b16 %v1055, %v1051
    %v1148 = vpack.c.b16 %v1056, %v1052
    %v1149 = vpack.c.b16 %v1057, %v1053
    %v1150 = vpack.c.b16 %v1058, %v1054
    %v1151 = vpack.c.b16 %v1063, %v1059
    %v1152 = vpack.c.b16 %v1064, %v1060
    %v1153 = vpack.c.b16 %v1065, %v1061
    %v1154 = vpack.c.b16 %v1066, %v1062
    %v1155 = vpack.c.b16 %v1071, %v1067
    %v1156 = vpack.c.b16 %v1072, %v1068
    %v1157 = vpack.c.b16 %v1073, %v1069
    %v1158 = vpack.c.b16 %v1074, %v1070
    %v1159 = vpack.c.b16 %v1079, %v1075
    %v1160 = vpack.c.b16 %v1080, %v1076
    %v1161 = vpack.c.b16 %v1081, %v1077
    %v1162 = vpack.c.b16 %v1082, %v1078
    %v1163 = vpack.c.b16 %v1087, %v1083
    %v1164 = vpack.c.b16 %v1088, %v1084
    %v1165 = vpack.c.b16 %v1089, %v1085
    %v1166 = vpack.c.b16 %v1090, %v1086
    %v1167 = vpack.c.b16 %v1095, %v1091
    %v1168 = vpack.c.b16 %v1096, %v1092
    %v1169 = vpack.c.b16 %v1097, %v1093
    %v1170 = vpack.c.b16 %v1098, %v1094
    %v1171 = vpack.c.b16 %v1103, %v1099
    %v1172 = vpack.c.b16 %v1104, %v1100
    %v1173 = vpack.c.b16 %v1105, %v1101
    %v1174 = vpack.c.b16 %v1106, %v1102
    %v1175 = vpack.c.b16 %v1111, %v1107
    %v1176 = vpack.c.b16 %v1112, %v1108
    %v1177 = vpack.c.b16 %v1113, %v1109
    %v1178 = vpack.c.b16 %v1114, %v1110
    %1243 = vmatprep.subr.bf16.mxu0 %v1116
    %1244 = vmatpush1.bf16.msra.mxu0 %v1115
    %1245 = vmatprep.subr.bf16.mxu0 %v1120
    %1246 = vmatpush1.bf16.msra.mxu0 %v1119
    %1247 = vmatprep.subr.bf16.mxu0 %v1124
    %1248 = vmatpush1.bf16.msra.mxu0 %v1123
    %1249 = vmatprep.subr.bf16.mxu0 %v1128
    %1250 = vmatpush1.bf16.msra.mxu0 %v1127
    %1251 = vmatprep.subr.bf16.mxu0 %v1132
    %1252 = vmatpush1.bf16.msra.mxu0 %v1131
    %1253 = vmatprep.subr.bf16.mxu0 %v1136
    %1254 = vmatpush1.bf16.msra.mxu0 %v1135
    %1255 = vmatprep.subr.bf16.mxu0 %v1140
    %1256 = vmatpush1.bf16.msra.mxu0 %v1139
    %1257 = vmatprep.subr.bf16.mxu0 %v1144
    %1258 = vmatpush1.bf16.msra.mxu0 %v1143
    %1259 = vmatprep.subr.bf16.mxu0 %v1148
    %1260 = vmatpush1.bf16.msra.mxu0 %v1147
    %1261 = vmatprep.subr.bf16.mxu0 %v1152
    %1262 = vmatpush1.bf16.msra.mxu0 %v1151
    %1263 = vmatprep.subr.bf16.mxu0 %v1156
    %1264 = vmatpush1.bf16.msra.mxu0 %v1155
    %1265 = vmatprep.subr.bf16.mxu0 %v1160
    %1266 = vmatpush1.bf16.msra.mxu0 %v1159
    %1267 = vmatprep.subr.bf16.mxu0 %v1164
    %1268 = vmatpush1.bf16.msra.mxu0 %v1163
    %1269 = vmatprep.subr.bf16.mxu0 %v1168
    %1270 = vmatpush1.bf16.msra.mxu0 %v1167
    %1271 = vmatprep.subr.bf16.mxu0 %v1172
    %1272 = vmatpush1.bf16.msra.mxu0 %v1171
    %1273 = vmatprep.subr.bf16.mxu0 %v1176
    %1274 = vmatpush1.bf16.msra.mxu0 %v1175
    %1275 = vmatprep.mubr.bf16.mxu0 %v844
    %1276 = vmatmul.mubr.bf16.gmra.mrb[0].mxu0 %v843
    %v1277 = vpop.f32.mrb[0].mxu0
    %v1278 = vadd.f32 0.0, %v1277
    %v1279 = vpop.f32.mrb[0].mxu0
    %v1280 = vadd.f32 0.0, %v1279
    %v1281 = vpop.f32.mrb[0].mxu0
    %v1282 = vadd.f32 0.0, %v1281
    %v1283 = vpop.f32.mrb[0].mxu0
    %v1284 = vadd.f32 0.0, %v1283
    %1285 = vmatprep.mubr.bf16.mxu0 %v846
    %1286 = vmatmul.mubr.bf16.gmra.mrb[0].mxu0 %v845
    %v1287 = vpop.f32.mrb[0].mxu0
    %v1288 = vadd.f32 0.0, %v1287
    %v1289 = vpop.f32.mrb[0].mxu0
    %v1290 = vadd.f32 0.0, %v1289
    %v1291 = vpop.f32.mrb[0].mxu0
    %v1292 = vadd.f32 0.0, %v1291
    %v1293 = vpop.f32.mrb[0].mxu0
    %v1294 = vadd.f32 0.0, %v1293
    %1295 = vmatprep.mubr.bf16.mxu0 %v848
    %1296 = vmatmul.mubr.bf16.gmra.mrb[0].mxu0 %v847
    %v1297 = vpop.f32.mrb[0].mxu0
    %v1298 = vadd.f32 0.0, %v1297
    %v1299 = vpop.f32.mrb[0].mxu0
    %v1300 = vadd.f32 0.0, %v1299
    %v1301 = vpop.f32.mrb[0].mxu0
    %v1302 = vadd.f32 0.0, %v1301
    %v1303 = vpop.f32.mrb[0].mxu0
    %v1304 = vadd.f32 0.0, %v1303
    %1305 = vmatprep.mubr.bf16.mxu0 %v850
    %1306 = vmatmul.mubr.bf16.gmra.mrb[0].mxu0 %v849
    %v1307 = vpop.f32.mrb[0].mxu0
    %v1308 = vadd.f32 0.0, %v1307
    %v1309 = vpop.f32.mrb[0].mxu0
    %v1310 = vadd.f32 0.0, %v1309
    %v1311 = vpop.f32.mrb[0].mxu0
    %v1312 = vadd.f32 0.0, %v1311
    %v1313 = vpop.f32.mrb[0].mxu0
    %v1314 = vadd.f32 0.0, %v1313
    %1315 = vmatprep.mubr.bf16.mxu0 %v852
    %1316 = vmatmul.mubr.bf16.gmra.mrb[0].mxu0 %v851
    %v1317 = vpop.f32.mrb[0].mxu0
    %v1318 = vadd.f32 0.0, %v1317
    %v1319 = vpop.f32.mrb[0].mxu0
    %v1320 = vadd.f32 0.0, %v1319
    %v1321 = vpop.f32.mrb[0].mxu0
    %v1322 = vadd.f32 0.0, %v1321
    %v1323 = vpop.f32.mrb[0].mxu0
    %v1324 = vadd.f32 0.0, %v1323
    %1325 = vmatprep.mubr.bf16.mxu0 %v854
    %1326 = vmatmul.mubr.bf16.gmra.mrb[0].mxu0 %v853
    %v1327 = vpop.f32.mrb[0].mxu0
    %v1328 = vadd.f32 0.0, %v1327
    %v1329 = vpop.f32.mrb[0].mxu0
    %v1330 = vadd.f32 0.0, %v1329
    %v1331 = vpop.f32.mrb[0].mxu0
    %v1332 = vadd.f32 0.0, %v1331
    %v1333 = vpop.f32.mrb[0].mxu0
    %v1334 = vadd.f32 0.0, %v1333
    %1335 = vmatprep.mubr.bf16.mxu0 %v856
    %1336 = vmatmul.mubr.bf16.gmra.mrb[0].mxu0 %v855
    %v1337 = vpop.f32.mrb[0].mxu0
    %v1338 = vadd.f32 0.0, %v1337
    %v1339 = vpop.f32.mrb[0].mxu0
    %v1340 = vadd.f32 0.0, %v1339
    %v1341 = vpop.f32.mrb[0].mxu0
    %v1342 = vadd.f32 0.0, %v1341
    %v1343 = vpop.f32.mrb[0].mxu0
    %v1344 = vadd.f32 0.0, %v1343
    %1345 = vmatprep.mubr.bf16.mxu0 %v858
    %1346 = vmatmul.mubr.bf16.gmra.mrb[0].mxu0 %v857
    %v1347 = vpop.f32.mrb[0].mxu0
    %v1348 = vadd.f32 0.0, %v1347
    %v1349 = vpop.f32.mrb[0].mxu0
    %v1350 = vadd.f32 0.0, %v1349
    %v1351 = vpop.f32.mrb[0].mxu0
    %v1352 = vadd.f32 0.0, %v1351
    %v1353 = vpop.f32.mrb[0].mxu0
    %v1354 = vadd.f32 0.0, %v1353
    %1355 = vdwg.mxu0
    %1356 = vmatprep.subr.bf16.mxu0 %v1118
    %1357 = vmatpush1.bf16.msra.mxu0 %v1117
    %1358 = vmatprep.subr.bf16.mxu0 %v1122
    %1359 = vmatpush1.bf16.msra.mxu0 %v1121
    %1360 = vmatprep.subr.bf16.mxu0 %v1126
    %1361 = vmatpush1.bf16.msra.mxu0 %v1125
    %1362 = vmatprep.subr.bf16.mxu0 %v1130
    %1363 = vmatpush1.bf16.msra.mxu0 %v1129
    %1364 = vmatprep.subr.bf16.mxu0 %v1134
    %1365 = vmatpush1.bf16.msra.mxu0 %v1133
    %1366 = vmatprep.subr.bf16.mxu0 %v1138
    %1367 = vmatpush1.bf16.msra.mxu0 %v1137
    %1368 = vmatprep.subr.bf16.mxu0 %v1142
    %1369 = vmatpush1.bf16.msra.mxu0 %v1141
    %1370 = vmatprep.subr.bf16.mxu0 %v1146
    %1371 = vmatpush1.bf16.msra.mxu0 %v1145
    %1372 = vmatprep.subr.bf16.mxu0 %v1150
    %1373 = vmatpush1.bf16.msra.mxu0 %v1149
    %1374 = vmatprep.subr.bf16.mxu0 %v1154
    %1375 = vmatpush1.bf16.msra.mxu0 %v1153
    %1376 = vmatprep.subr.bf16.mxu0 %v1158
    %1377 = vmatpush1.bf16.msra.mxu0 %v1157
    %1378 = vmatprep.subr.bf16.mxu0 %v1162
    %1379 = vmatpush1.bf16.msra.mxu0 %v1161
    %1380 = vmatprep.subr.bf16.mxu0 %v1166
    %1381 = vmatpush1.bf16.msra.mxu0 %v1165
    %1382 = vmatprep.subr.bf16.mxu0 %v1170
    %1383 = vmatpush1.bf16.msra.mxu0 %v1169
    %1384 = vmatprep.subr.bf16.mxu0 %v1174
    %1385 = vmatpush1.bf16.msra.mxu0 %v1173
    %1386 = vmatprep.subr.bf16.mxu0 %v1178
    %1387 = vmatpush1.bf16.msra.mxu0 %v1177
    %1388 = vmatprep.mubr.bf16.mxu0 %v844
    %1389 = vmatmul.mubr.bf16.gmra.mrb[0].mxu0 %v843
    %v1390 = vpop.f32.mrb[0].mxu0
    %v1391 = vadd.f32 0.0, %v1390
    %v1392 = vpop.f32.mrb[0].mxu0
    %v1393 = vadd.f32 0.0, %v1392
    %v1394 = vpop.f32.mrb[0].mxu0
    %v1395 = vadd.f32 0.0, %v1394
    %v1396 = vpop.f32.mrb[0].mxu0
    %v1397 = vadd.f32 0.0, %v1396
    %1398 = vmatprep.mubr.bf16.mxu0 %v846
    %1399 = vmatmul.mubr.bf16.gmra.mrb[0].mxu0 %v845
    %v1400 = vpop.f32.mrb[0].mxu0
    %v1401 = vadd.f32 0.0, %v1400
    %v1402 = vpop.f32.mrb[0].mxu0
    %v1403 = vadd.f32 0.0, %v1402
    %v1404 = vpop.f32.mrb[0].mxu0
    %v1405 = vadd.f32 0.0, %v1404
    %v1406 = vpop.f32.mrb[0].mxu0
    %v1407 = vadd.f32 0.0, %v1406
    %1408 = vmatprep.mubr.bf16.mxu0 %v848
    %1409 = vmatmul.mubr.bf16.gmra.mrb[0].mxu0 %v847
    %v1410 = vpop.f32.mrb[0].mxu0
    %v1411 = vadd.f32 0.0, %v1410
    %v1412 = vpop.f32.mrb[0].mxu0
    %v1413 = vadd.f32 0.0, %v1412
    %v1414 = vpop.f32.mrb[0].mxu0
    %v1415 = vadd.f32 0.0, %v1414
    %v1416 = vpop.f32.mrb[0].mxu0
    %v1417 = vadd.f32 0.0, %v1416
    %1418 = vmatprep.mubr.bf16.mxu0 %v850
    %1419 = vmatmul.mubr.bf16.gmra.mrb[0].mxu0 %v849
    %v1420 = vpop.f32.mrb[0].mxu0
    %v1421 = vadd.f32 0.0, %v1420
    %v1422 = vpop.f32.mrb[0].mxu0
    %v1423 = vadd.f32 0.0, %v1422
    %v1424 = vpop.f32.mrb[0].mxu0
    %v1425 = vadd.f32 0.0, %v1424
    %v1426 = vpop.f32.mrb[0].mxu0
    %v1427 = vadd.f32 0.0, %v1426
    %1428 = vmatprep.mubr.bf16.mxu0 %v852
    %1429 = vmatmul.mubr.bf16.gmra.mrb[0].mxu0 %v851
    %v1430 = vpop.f32.mrb[0].mxu0
    %v1431 = vadd.f32 0.0, %v1430
    %v1432 = vpop.f32.mrb[0].mxu0
    %v1433 = vadd.f32 0.0, %v1432
    %v1434 = vpop.f32.mrb[0].mxu0
    %v1435 = vadd.f32 0.0, %v1434
    %v1436 = vpop.f32.mrb[0].mxu0
    %v1437 = vadd.f32 0.0, %v1436
    %1438 = vmatprep.mubr.bf16.mxu0 %v854
    %1439 = vmatmul.mubr.bf16.gmra.mrb[0].mxu0 %v853
    %v1440 = vpop.f32.mrb[0].mxu0
    %v1441 = vadd.f32 0.0, %v1440
    %v1442 = vpop.f32.mrb[0].mxu0
    %v1443 = vadd.f32 0.0, %v1442
    %v1444 = vpop.f32.mrb[0].mxu0
    %v1445 = vadd.f32 0.0, %v1444
    %v1446 = vpop.f32.mrb[0].mxu0
    %v1447 = vadd.f32 0.0, %v1446
    %1448 = vmatprep.mubr.bf16.mxu0 %v856
    %1449 = vmatmul.mubr.bf16.gmra.mrb[0].mxu0 %v855
    %v1450 = vpop.f32.mrb[0].mxu0
    %v1451 = vadd.f32 0.0, %v1450
    %v1452 = vpop.f32.mrb[0].mxu0
    %v1453 = vadd.f32 0.0, %v1452
    %v1454 = vpop.f32.mrb[0].mxu0
    %v1455 = vadd.f32 0.0, %v1454
    %v1456 = vpop.f32.mrb[0].mxu0
    %v1457 = vadd.f32 0.0, %v1456
    %1458 = vmatprep.mubr.bf16.mxu0 %v858
    %1459 = vmatmul.mubr.bf16.gmra.mrb[0].mxu0 %v857
    %v1460 = vpop.f32.mrb[0].mxu0
    %v1461 = vadd.f32 0.0, %v1460
    %v1462 = vpop.f32.mrb[0].mxu0
    %v1463 = vadd.f32 0.0, %v1462
    %v1464 = vpop.f32.mrb[0].mxu0
    %v1465 = vadd.f32 0.0, %v1464
    %v1466 = vpop.f32.mrb[0].mxu0
    %v1467 = vadd.f32 0.0, %v1466
    %1468 = vdwg.mxu0
    %v1469 = vadd.f32 %v1278, %v1282
    %v1470 = vadd.f32 %v1469, %v1288
    %v1471 = vadd.f32 %v1470, %v1292
    %v1472 = vadd.f32 %v1471, %v1298
    %v1473 = vadd.f32 %v1472, %v1302
    %v1474 = vadd.f32 %v1473, %v1308
    %v1475 = vadd.f32 %v1474, %v1312
    %v1476 = vadd.f32 %v1475, %v1318
    %v1477 = vadd.f32 %v1476, %v1322
    %v1478 = vadd.f32 %v1477, %v1328
    %v1479 = vadd.f32 %v1478, %v1332
    %v1480 = vadd.f32 %v1479, %v1338
    %v1481 = vadd.f32 %v1480, %v1342
    %v1482 = vadd.f32 %v1481, %v1348
    %v1483 = vadd.f32 %v1482, %v1352
    %v1484 = vrot.slane %v1483, 4
    %v1485 = vadd.f32 %v1483, %v1484
    %v1486 = vrot.slane %v1485, 2
    %v1487 = vadd.f32 %v1485, %v1486
    %v1488 = vrot.slane %v1487, 1
    %v1489 = vadd.f32 %v1487, %v1488
    %v1490 = vadd.f32 %v1280, %v1284
    %v1491 = vadd.f32 %v1490, %v1290
    %v1492 = vadd.f32 %v1491, %v1294
    %v1493 = vadd.f32 %v1492, %v1300
    %v1494 = vadd.f32 %v1493, %v1304
    %v1495 = vadd.f32 %v1494, %v1310
    %v1496 = vadd.f32 %v1495, %v1314
    %v1497 = vadd.f32 %v1496, %v1320
    %v1498 = vadd.f32 %v1497, %v1324
    %v1499 = vadd.f32 %v1498, %v1330
    %v1500 = vadd.f32 %v1499, %v1334
    %v1501 = vadd.f32 %v1500, %v1340
    %v1502 = vadd.f32 %v1501, %v1344
    %v1503 = vadd.f32 %v1502, %v1350
    %v1504 = vadd.f32 %v1503, %v1354
    %v1505 = vrot.slane %v1504, 4
    %v1506 = vadd.f32 %v1504, %v1505
    %v1507 = vrot.slane %v1506, 2
    %v1508 = vadd.f32 %v1506, %v1507
    %v1509 = vrot.slane %v1508, 1
    %v1510 = vadd.f32 %v1508, %v1509
    %v1511 = vadd.f32 %v1391, %v1395
    %v1512 = vadd.f32 %v1511, %v1401
    %v1513 = vadd.f32 %v1512, %v1405
    %v1514 = vadd.f32 %v1513, %v1411
    %v1515 = vadd.f32 %v1514, %v1415
    %v1516 = vadd.f32 %v1515, %v1421
    %v1517 = vadd.f32 %v1516, %v1425
    %v1518 = vadd.f32 %v1517, %v1431
    %v1519 = vadd.f32 %v1518, %v1435
    %v1520 = vadd.f32 %v1519, %v1441
    %v1521 = vadd.f32 %v1520, %v1445
    %v1522 = vadd.f32 %v1521, %v1451
    %v1523 = vadd.f32 %v1522, %v1455
    %v1524 = vadd.f32 %v1523, %v1461
    %v1525 = vadd.f32 %v1524, %v1465
    %v1526 = vrot.slane %v1525, 4
    %v1527 = vadd.f32 %v1525, %v1526
    %v1528 = vrot.slane %v1527, 2
    %v1529 = vadd.f32 %v1527, %v1528
    %v1530 = vrot.slane %v1529, 1
    %v1531 = vadd.f32 %v1529, %v1530
    %v1532 = vadd.f32 %v1393, %v1397
    %v1533 = vadd.f32 %v1532, %v1403
    %v1534 = vadd.f32 %v1533, %v1407
    %v1535 = vadd.f32 %v1534, %v1413
    %v1536 = vadd.f32 %v1535, %v1417
    %v1537 = vadd.f32 %v1536, %v1423
    %v1538 = vadd.f32 %v1537, %v1427
    %v1539 = vadd.f32 %v1538, %v1433
    %v1540 = vadd.f32 %v1539, %v1437
    %v1541 = vadd.f32 %v1540, %v1443
    %v1542 = vadd.f32 %v1541, %v1447
    %v1543 = vadd.f32 %v1542, %v1453
    %v1544 = vadd.f32 %v1543, %v1457
    %v1545 = vadd.f32 %v1544, %v1463
    %v1546 = vadd.f32 %v1545, %v1467
    %v1547 = vrot.slane %v1546, 4
    %v1548 = vadd.f32 %v1546, %v1547
    %v1549 = vrot.slane %v1548, 2
    %v1550 = vadd.f32 %v1548, %v1549
    %v1551 = vrot.slane %v1550, 1
    %v1552 = vadd.f32 %v1550, %v1551
    %v1553 = vrcp.pop 128.0
    %v1554 = vmul.f32 %v1489, %v1553
    %v1555 = vmul.f32 %v1510, %v1553
    %v1556 = vmul.f32 %v1531, %v1553
    %v1557 = vmul.f32 %v1552, %v1553
    %v1558 = vmul.f32 %v1278, %v1278
    %v1559 = vmul.f32 %v1280, %v1280
    %v1560 = vmul.f32 %v1391, %v1391
    %v1561 = vmul.f32 %v1393, %v1393
    %v1562 = vmul.f32 %v1282, %v1282
    %v1563 = vmul.f32 %v1284, %v1284
    %v1564 = vmul.f32 %v1395, %v1395
    %v1565 = vmul.f32 %v1397, %v1397
    %v1566 = vmul.f32 %v1288, %v1288
    %v1567 = vmul.f32 %v1290, %v1290
    %v1568 = vmul.f32 %v1401, %v1401
    %v1569 = vmul.f32 %v1403, %v1403
    %v1570 = vmul.f32 %v1292, %v1292
    %v1571 = vmul.f32 %v1294, %v1294
    %v1572 = vmul.f32 %v1405, %v1405
    %v1573 = vmul.f32 %v1407, %v1407
    %v1574 = vmul.f32 %v1298, %v1298
    %v1575 = vmul.f32 %v1300, %v1300
    %v1576 = vmul.f32 %v1411, %v1411
    %v1577 = vmul.f32 %v1413, %v1413
    %v1578 = vmul.f32 %v1302, %v1302
    %v1579 = vmul.f32 %v1304, %v1304
    %v1580 = vmul.f32 %v1415, %v1415
    %v1581 = vmul.f32 %v1417, %v1417
    %v1582 = vmul.f32 %v1308, %v1308
    %v1583 = vmul.f32 %v1310, %v1310
    %v1584 = vmul.f32 %v1421, %v1421
    %v1585 = vmul.f32 %v1423, %v1423
    %v1586 = vmul.f32 %v1312, %v1312
    %v1587 = vmul.f32 %v1314, %v1314
    %v1588 = vmul.f32 %v1425, %v1425
    %v1589 = vmul.f32 %v1427, %v1427
    %v1590 = vmul.f32 %v1318, %v1318
    %v1591 = vmul.f32 %v1320, %v1320
    %v1592 = vmul.f32 %v1431, %v1431
    %v1593 = vmul.f32 %v1433, %v1433
    %v1594 = vmul.f32 %v1322, %v1322
    %v1595 = vmul.f32 %v1324, %v1324
    %v1596 = vmul.f32 %v1435, %v1435
    %v1597 = vmul.f32 %v1437, %v1437
    %v1598 = vmul.f32 %v1328, %v1328
    %v1599 = vmul.f32 %v1330, %v1330
    %v1600 = vmul.f32 %v1441, %v1441
    %v1601 = vmul.f32 %v1443, %v1443
    %v1602 = vmul.f32 %v1332, %v1332
    %v1603 = vmul.f32 %v1334, %v1334
    %v1604 = vmul.f32 %v1445, %v1445
    %v1605 = vmul.f32 %v1447, %v1447
    %v1606 = vmul.f32 %v1338, %v1338
    %v1607 = vmul.f32 %v1340, %v1340
    %v1608 = vmul.f32 %v1451, %v1451
    %v1609 = vmul.f32 %v1453, %v1453
    %v1610 = vmul.f32 %v1342, %v1342
    %v1611 = vmul.f32 %v1344, %v1344
    %v1612 = vmul.f32 %v1455, %v1455
    %v1613 = vmul.f32 %v1457, %v1457
    %v1614 = vmul.f32 %v1348, %v1348
    %v1615 = vmul.f32 %v1350, %v1350
    %v1616 = vmul.f32 %v1461, %v1461
    %v1617 = vmul.f32 %v1463, %v1463
    %v1618 = vmul.f32 %v1352, %v1352
    %v1619 = vmul.f32 %v1354, %v1354
    %v1620 = vmul.f32 %v1465, %v1465
    %v1621 = vmul.f32 %v1467, %v1467
    %v1622 = vadd.f32 %v1558, %v1562
    %v1623 = vadd.f32 %v1622, %v1566
    %v1624 = vadd.f32 %v1623, %v1570
    %v1625 = vadd.f32 %v1624, %v1574
    %v1626 = vadd.f32 %v1625, %v1578
    %v1627 = vadd.f32 %v1626, %v1582
    %v1628 = vadd.f32 %v1627, %v1586
    %v1629 = vadd.f32 %v1628, %v1590
    %v1630 = vadd.f32 %v1629, %v1594
    %v1631 = vadd.f32 %v1630, %v1598
    %v1632 = vadd.f32 %v1631, %v1602
    %v1633 = vadd.f32 %v1632, %v1606
    %v1634 = vadd.f32 %v1633, %v1610
    %v1635 = vadd.f32 %v1634, %v1614
    %v1636 = vadd.f32 %v1635, %v1618
    %v1637 = vrot.slane %v1636, 4
    %v1638 = vadd.f32 %v1636, %v1637
    %v1639 = vrot.slane %v1638, 2
    %v1640 = vadd.f32 %v1638, %v1639
    %v1641 = vrot.slane %v1640, 1
    %v1642 = vadd.f32 %v1640, %v1641
    %v1643 = vadd.f32 %v1559, %v1563
    %v1644 = vadd.f32 %v1643, %v1567
    %v1645 = vadd.f32 %v1644, %v1571
    %v1646 = vadd.f32 %v1645, %v1575
    %v1647 = vadd.f32 %v1646, %v1579
    %v1648 = vadd.f32 %v1647, %v1583
    %v1649 = vadd.f32 %v1648, %v1587
    %v1650 = vadd.f32 %v1649, %v1591
    %v1651 = vadd.f32 %v1650, %v1595
    %v1652 = vadd.f32 %v1651, %v1599
    %v1653 = vadd.f32 %v1652, %v1603
    %v1654 = vadd.f32 %v1653, %v1607
    %v1655 = vadd.f32 %v1654, %v1611
    %v1656 = vadd.f32 %v1655, %v1615
    %v1657 = vadd.f32 %v1656, %v1619
    %v1658 = vrot.slane %v1657, 4
    %v1659 = vadd.f32 %v1657, %v1658
    %v1660 = vrot.slane %v1659, 2
    %v1661 = vadd.f32 %v1659, %v1660
    %v1662 = vrot.slane %v1661, 1
    %v1663 = vadd.f32 %v1661, %v1662
    %v1664 = vadd.f32 %v1560, %v1564
    %v1665 = vadd.f32 %v1664, %v1568
    %v1666 = vadd.f32 %v1665, %v1572
    %v1667 = vadd.f32 %v1666, %v1576
    %v1668 = vadd.f32 %v1667, %v1580
    %v1669 = vadd.f32 %v1668, %v1584
    %v1670 = vadd.f32 %v1669, %v1588
    %v1671 = vadd.f32 %v1670, %v1592
    %v1672 = vadd.f32 %v1671, %v1596
    %v1673 = vadd.f32 %v1672, %v1600
    %v1674 = vadd.f32 %v1673, %v1604
    %v1675 = vadd.f32 %v1674, %v1608
    %v1676 = vadd.f32 %v1675, %v1612
    %v1677 = vadd.f32 %v1676, %v1616
    %v1678 = vadd.f32 %v1677, %v1620
    %v1679 = vrot.slane %v1678, 4
    %v1680 = vadd.f32 %v1678, %v1679
    %v1681 = vrot.slane %v1680, 2
    %v1682 = vadd.f32 %v1680, %v1681
    %v1683 = vrot.slane %v1682, 1
    %v1684 = vadd.f32 %v1682, %v1683
    %v1685 = vadd.f32 %v1561, %v1565
    %v1686 = vadd.f32 %v1685, %v1569
    %v1687 = vadd.f32 %v1686, %v1573
    %v1688 = vadd.f32 %v1687, %v1577
    %v1689 = vadd.f32 %v1688, %v1581
    %v1690 = vadd.f32 %v1689, %v1585
    %v1691 = vadd.f32 %v1690, %v1589
    %v1692 = vadd.f32 %v1691, %v1593
    %v1693 = vadd.f32 %v1692, %v1597
    %v1694 = vadd.f32 %v1693, %v1601
    %v1695 = vadd.f32 %v1694, %v1605
    %v1696 = vadd.f32 %v1695, %v1609
    %v1697 = vadd.f32 %v1696, %v1613
    %v1698 = vadd.f32 %v1697, %v1617
    %v1699 = vadd.f32 %v1698, %v1621
    %v1700 = vrot.slane %v1699, 4
    %v1701 = vadd.f32 %v1699, %v1700
    %v1702 = vrot.slane %v1701, 2
    %v1703 = vadd.f32 %v1701, %v1702
    %v1704 = vrot.slane %v1703, 1
    %v1705 = vadd.f32 %v1703, %v1704
    %v1706 = vmul.f32 %v1642, %v1553
    %v1707 = vmul.f32 %v1663, %v1553
    %v1708 = vmul.f32 %v1684, %v1553
    %v1709 = vmul.f32 %v1705, %v1553
    %v1710 = vmul.f32 %v1554, %v1554
    %v1711 = vmul.f32 %v1555, %v1555
    %v1712 = vmul.f32 %v1556, %v1556
    %v1713 = vmul.f32 %v1557, %v1557
    %v1714 = vsub.f32 %v1706, %v1710
    %v1715 = vsub.f32 %v1707, %v1711
    %v1716 = vsub.f32 %v1708, %v1712
    %v1717 = vsub.f32 %v1709, %v1713
    %v1718 = vmax.f32 %v1714, 0.0
    %v1719 = vmax.f32 %v1715, 0.0
    %v1720 = vmax.f32 %v1716, 0.0
    %v1721 = vmax.f32 %v1717, 0.0
    %v1722 = vadd.f32 %v1718, 1e-05
    %v1723 = vadd.f32 %v1719, 1e-05
    %v1724 = vadd.f32 %v1720, 1e-05
    %v1725 = vadd.f32 %v1721, 1e-05
    %v1726 = vrsqrt.pop %v1722
    %v1727 = vrsqrt.pop %v1723
    %v1728 = vrsqrt.pop %v1724
    %v1729 = vrsqrt.pop %v1725
    %v1730 = vld [vmem:[%s7] sm:$0xf]
    %v1732 = vlaneseq
    %v1733 = vshrl.u32 %v1732, 7
    %v1734 = vsub.s32 0, %v1733
    %v1735 = vrot.slane %v1730, %v1734
    %v1736 = vlaneseq
    %v1737 = vshrl.u32 %v1736, 7
    %v1738 = vsub.s32 1, %v1737
    %v1739 = vrot.slane %v1730, %v1738
    %v1740 = vlaneseq
    %v1741 = vshrl.u32 %v1740, 7
    %v1742 = vsub.s32 2, %v1741
    %v1743 = vrot.slane %v1730, %v1742
    %v1744 = vlaneseq
    %v1745 = vshrl.u32 %v1744, 7
    %v1746 = vsub.s32 3, %v1745
    %v1747 = vrot.slane %v1730, %v1746
    %v1752 = vmul.f32 %v1726, %v1735
    %v1753 = vmul.f32 %v1727, %v1739
    %v1754 = vmul.f32 %v1728, %v1743
    %v1755 = vmul.f32 %v1729, %v1747
    %v1756 = vld [vmem:[%s8] sm:$0xf]
    %v1757 = vmul.f32 %v1554, %v1752
    %v1758 = vmul.f32 %v1555, %v1753
    %v1759 = vmul.f32 %v1556, %v1754
    %v1760 = vmul.f32 %v1557, %v1755
    %v1765 = vcombine.low %v1757, %v1758
    %v1766 = vcombine.low %v1759, %v1760
    %v1768 = vunpack.c.l.s4 1966171168
    %v1769 = vunpack.c.0.s8 %v1768
    %v1770 = vlaneseq
    %v1771 = vshrl.u32 %v1770, 7
    %v1772 = vsub.s32 %v1769, %v1771
    %v1773 = vrot.slane %v1765, %v1772
    %v1775 = vunpack.c.l.s4 1966171168
    %v1776 = vunpack.c.0.s8 %v1775
    %v1777 = vlaneseq
    %v1778 = vshrl.u32 %v1777, 7
    %v1779 = vsub.s32 %v1776, %v1778
    %v1780 = vrot.slane %v1766, %v1779
    %v1781 = vcombine.low %v1773, %v1780
    %v1783 = vunpack.c.l.s4 1966171168
    %v1784 = vunpack.c.0.s8 %v1783
    %v1785 = vlaneseq
    %v1786 = vshrl.u32 %v1785, 7
    %v1787 = vsub.s32 %v1784, %v1786
    %v1788 = vrot.slane %v1781, %v1787
    %v1790 = vsub.f32 %v1756, %v1788
    %v1791 = vlaneseq
    %v1792 = vshrl.u32 %v1791, 7
    %v1793 = vsub.s32 0, %v1792
    %v1794 = vrot.slane %v1752, %v1793
    %v1795 = vlaneseq
    %v1796 = vshrl.u32 %v1795, 7
    %v1797 = vsub.s32 0, %v1796
    %v1798 = vrot.slane %v1753, %v1797
    %v1799 = vlaneseq
    %v1800 = vshrl.u32 %v1799, 7
    %v1801 = vsub.s32 0, %v1800
    %v1802 = vrot.slane %v1754, %v1801
    %v1803 = vlaneseq
    %v1804 = vshrl.u32 %v1803, 7
    %v1805 = vsub.s32 0, %v1804
    %v1806 = vrot.slane %v1755, %v1805
    %v1807 = vmul.f32 %v1278, %v1794
    %v1808 = vmul.f32 %v1280, %v1798
    %v1809 = vmul.f32 %v1391, %v1802
    %v1810 = vmul.f32 %v1393, %v1806
    %v1811 = vmul.f32 %v1282, %v1794
    %v1812 = vmul.f32 %v1284, %v1798
    %v1813 = vmul.f32 %v1395, %v1802
    %v1814 = vmul.f32 %v1397, %v1806
    %v1815 = vmul.f32 %v1288, %v1794
    %v1816 = vmul.f32 %v1290, %v1798
    %v1817 = vmul.f32 %v1401, %v1802
    %v1818 = vmul.f32 %v1403, %v1806
    %v1819 = vmul.f32 %v1292, %v1794
    %v1820 = vmul.f32 %v1294, %v1798
    %v1821 = vmul.f32 %v1405, %v1802
    %v1822 = vmul.f32 %v1407, %v1806
    %v1823 = vmul.f32 %v1298, %v1794
    %v1824 = vmul.f32 %v1300, %v1798
    %v1825 = vmul.f32 %v1411, %v1802
    %v1826 = vmul.f32 %v1413, %v1806
    %v1827 = vmul.f32 %v1302, %v1794
    %v1828 = vmul.f32 %v1304, %v1798
    %v1829 = vmul.f32 %v1415, %v1802
    %v1830 = vmul.f32 %v1417, %v1806
    %v1831 = vmul.f32 %v1308, %v1794
    %v1832 = vmul.f32 %v1310, %v1798
    %v1833 = vmul.f32 %v1421, %v1802
    %v1834 = vmul.f32 %v1423, %v1806
    %v1835 = vmul.f32 %v1312, %v1794
    %v1836 = vmul.f32 %v1314, %v1798
    %v1837 = vmul.f32 %v1425, %v1802
    %v1838 = vmul.f32 %v1427, %v1806
    %v1839 = vmul.f32 %v1318, %v1794
    %v1840 = vmul.f32 %v1320, %v1798
    %v1841 = vmul.f32 %v1431, %v1802
    %v1842 = vmul.f32 %v1433, %v1806
    %v1843 = vmul.f32 %v1322, %v1794
    %v1844 = vmul.f32 %v1324, %v1798
    %v1845 = vmul.f32 %v1435, %v1802
    %v1846 = vmul.f32 %v1437, %v1806
    %v1847 = vmul.f32 %v1328, %v1794
    %v1848 = vmul.f32 %v1330, %v1798
    %v1849 = vmul.f32 %v1441, %v1802
    %v1850 = vmul.f32 %v1443, %v1806
    %v1851 = vmul.f32 %v1332, %v1794
    %v1852 = vmul.f32 %v1334, %v1798
    %v1853 = vmul.f32 %v1445, %v1802
    %v1854 = vmul.f32 %v1447, %v1806
    %v1855 = vmul.f32 %v1338, %v1794
    %v1856 = vmul.f32 %v1340, %v1798
    %v1857 = vmul.f32 %v1451, %v1802
    %v1858 = vmul.f32 %v1453, %v1806
    %v1859 = vmul.f32 %v1342, %v1794
    %v1860 = vmul.f32 %v1344, %v1798
    %v1861 = vmul.f32 %v1455, %v1802
    %v1862 = vmul.f32 %v1457, %v1806
    %v1863 = vmul.f32 %v1348, %v1794
    %v1864 = vmul.f32 %v1350, %v1798
    %v1865 = vmul.f32 %v1461, %v1802
    %v1866 = vmul.f32 %v1463, %v1806
    %v1867 = vmul.f32 %v1352, %v1794
    %v1868 = vmul.f32 %v1354, %v1798
    %v1869 = vmul.f32 %v1465, %v1802
    %v1870 = vmul.f32 %v1467, %v1806
    %v1872 = vlaneseq
    %v1873 = vshrl.u32 %v1872, 7
    %v1874 = vsub.s32 0, %v1873
    %v1875 = vrot.slane %v1790, %v1874
    %v1876 = vlaneseq
    %v1877 = vshrl.u32 %v1876, 7
    %v1878 = vsub.s32 1, %v1877
    %v1879 = vrot.slane %v1790, %v1878
    %v1880 = vlaneseq
    %v1881 = vshrl.u32 %v1880, 7
    %v1882 = vsub.s32 2, %v1881
    %v1883 = vrot.slane %v1790, %v1882
    %v1884 = vlaneseq
    %v1885 = vshrl.u32 %v1884, 7
    %v1886 = vsub.s32 3, %v1885
    %v1887 = vrot.slane %v1790, %v1886
    %v1892 = vadd.f32 %v1807, %v1875
    %v1893 = vadd.f32 %v1808, %v1879
    %v1894 = vadd.f32 %v1809, %v1883
    %v1895 = vadd.f32 %v1810, %v1887
    %v1896 = vadd.f32 %v1811, %v1875
    %v1897 = vadd.f32 %v1812, %v1879
    %v1898 = vadd.f32 %v1813, %v1883
    %v1899 = vadd.f32 %v1814, %v1887
    %v1900 = vadd.f32 %v1815, %v1875
    %v1901 = vadd.f32 %v1816, %v1879
    %v1902 = vadd.f32 %v1817, %v1883
    %v1903 = vadd.f32 %v1818, %v1887
    %v1904 = vadd.f32 %v1819, %v1875
    %v1905 = vadd.f32 %v1820, %v1879
    %v1906 = vadd.f32 %v1821, %v1883
    %v1907 = vadd.f32 %v1822, %v1887
    %v1908 = vadd.f32 %v1823, %v1875
    %v1909 = vadd.f32 %v1824, %v1879
    %v1910 = vadd.f32 %v1825, %v1883
    %v1911 = vadd.f32 %v1826, %v1887
    %v1912 = vadd.f32 %v1827, %v1875
    %v1913 = vadd.f32 %v1828, %v1879
    %v1914 = vadd.f32 %v1829, %v1883
    %v1915 = vadd.f32 %v1830, %v1887
    %v1916 = vadd.f32 %v1831, %v1875
    %v1917 = vadd.f32 %v1832, %v1879
    %v1918 = vadd.f32 %v1833, %v1883
    %v1919 = vadd.f32 %v1834, %v1887
    %v1920 = vadd.f32 %v1835, %v1875
    %v1921 = vadd.f32 %v1836, %v1879
    %v1922 = vadd.f32 %v1837, %v1883
    %v1923 = vadd.f32 %v1838, %v1887
    %v1924 = vadd.f32 %v1839, %v1875
    %v1925 = vadd.f32 %v1840, %v1879
    %v1926 = vadd.f32 %v1841, %v1883
    %v1927 = vadd.f32 %v1842, %v1887
    %v1928 = vadd.f32 %v1843, %v1875
    %v1929 = vadd.f32 %v1844, %v1879
    %v1930 = vadd.f32 %v1845, %v1883
    %v1931 = vadd.f32 %v1846, %v1887
    %v1932 = vadd.f32 %v1847, %v1875
    %v1933 = vadd.f32 %v1848, %v1879
    %v1934 = vadd.f32 %v1849, %v1883
    %v1935 = vadd.f32 %v1850, %v1887
    %v1936 = vadd.f32 %v1851, %v1875
    %v1937 = vadd.f32 %v1852, %v1879
    %v1938 = vadd.f32 %v1853, %v1883
    %v1939 = vadd.f32 %v1854, %v1887
    %v1940 = vadd.f32 %v1855, %v1875
    %v1941 = vadd.f32 %v1856, %v1879
    %v1942 = vadd.f32 %v1857, %v1883
    %v1943 = vadd.f32 %v1858, %v1887
    %v1944 = vadd.f32 %v1859, %v1875
    %v1945 = vadd.f32 %v1860, %v1879
    %v1946 = vadd.f32 %v1861, %v1883
    %v1947 = vadd.f32 %v1862, %v1887
    %v1948 = vadd.f32 %v1863, %v1875
    %v1949 = vadd.f32 %v1864, %v1879
    %v1950 = vadd.f32 %v1865, %v1883
    %v1951 = vadd.f32 %v1866, %v1887
    %v1952 = vadd.f32 %v1867, %v1875
    %v1953 = vadd.f32 %v1868, %v1879
    %v1954 = vadd.f32 %v1869, %v1883
    %v1955 = vadd.f32 %v1870, %v1887
    %1956 = vst [vmem:[#allocation2] sm:$0xff] %v1892
    %1957 = vst [vmem:[#allocation2 + $0x8] sm:$0xff] %v1893
    %1958 = vst [vmem:[#allocation2 + $0x10] sm:$0xff] %v1894
    %1959 = vst [vmem:[#allocation2 + $0x18] sm:$0xff] %v1895
    %1960 = vst [vmem:[#allocation2 + $0x20] sm:$0xff] %v1896
    %1961 = vst [vmem:[#allocation2 + $0x28] sm:$0xff] %v1897
    %1962 = vst [vmem:[#allocation2 + $0x30] sm:$0xff] %v1898
    %1963 = vst [vmem:[#allocation2 + $0x38] sm:$0xff] %v1899
    %1964 = vst [vmem:[#allocation2 + $0x40] sm:$0xff] %v1900
    %1965 = vst [vmem:[#allocation2 + $0x48] sm:$0xff] %v1901
    %1966 = vst [vmem:[#allocation2 + $0x50] sm:$0xff] %v1902
    %1967 = vst [vmem:[#allocation2 + $0x58] sm:$0xff] %v1903
    %1968 = vst [vmem:[#allocation2 + $0x60] sm:$0xff] %v1904
    %1969 = vst [vmem:[#allocation2 + $0x68] sm:$0xff] %v1905
    %1970 = vst [vmem:[#allocation2 + $0x70] sm:$0xff] %v1906
    %1971 = vst [vmem:[#allocation2 + $0x78] sm:$0xff] %v1907
    %1972 = vst [vmem:[#allocation2 + $0x80] sm:$0xff] %v1908
    %1973 = vst [vmem:[#allocation2 + $0x88] sm:$0xff] %v1909
    %1974 = vst [vmem:[#allocation2 + $0x90] sm:$0xff] %v1910
    %1975 = vst [vmem:[#allocation2 + $0x98] sm:$0xff] %v1911
    %1976 = vst [vmem:[#allocation2 + $0xa0] sm:$0xff] %v1912
    %1977 = vst [vmem:[#allocation2 + $0xa8] sm:$0xff] %v1913
    %1978 = vst [vmem:[#allocation2 + $0xb0] sm:$0xff] %v1914
    %1979 = vst [vmem:[#allocation2 + $0xb8] sm:$0xff] %v1915
    %1980 = vst [vmem:[#allocation2 + $0xc0] sm:$0xff] %v1916
    %1981 = vst [vmem:[#allocation2 + $0xc8] sm:$0xff] %v1917
    %1982 = vst [vmem:[#allocation2 + $0xd0] sm:$0xff] %v1918
    %1983 = vst [vmem:[#allocation2 + $0xd8] sm:$0xff] %v1919
    %1984 = vst [vmem:[#allocation2 + $0xe0] sm:$0xff] %v1920
    %1985 = vst [vmem:[#allocation2 + $0xe8] sm:$0xff] %v1921
    %1986 = vst [vmem:[#allocation2 + $0xf0] sm:$0xff] %v1922
    %1987 = vst [vmem:[#allocation2 + $0xf8] sm:$0xff] %v1923
    %1988 = vst [vmem:[#allocation2 + $0x100] sm:$0xff] %v1924
    %1989 = vst [vmem:[#allocation2 + $0x108] sm:$0xff] %v1925
    %1990 = vst [vmem:[#allocation2 + $0x110] sm:$0xff] %v1926
    %1991 = vst [vmem:[#allocation2 + $0x118] sm:$0xff] %v1927
    %1992 = vst [vmem:[#allocation2 + $0x120] sm:$0xff] %v1928
    %1993 = vst [vmem:[#allocation2 + $0x128] sm:$0xff] %v1929
    %1994 = vst [vmem:[#allocation2 + $0x130] sm:$0xff] %v1930
    %1995 = vst [vmem:[#allocation2 + $0x138] sm:$0xff] %v1931
    %1996 = vst [vmem:[#allocation2 + $0x140] sm:$0xff] %v1932
    %1997 = vst [vmem:[#allocation2 + $0x148] sm:$0xff] %v1933
    %1998 = vst [vmem:[#allocation2 + $0x150] sm:$0xff] %v1934
    %1999 = vst [vmem:[#allocation2 + $0x158] sm:$0xff] %v1935
    %2000 = vst [vmem:[#allocation2 + $0x160] sm:$0xff] %v1936
    %2001 = vst [vmem:[#allocation2 + $0x168] sm:$0xff] %v1937
    %2002 = vst [vmem:[#allocation2 + $0x170] sm:$0xff] %v1938
    %2003 = vst [vmem:[#allocation2 + $0x178] sm:$0xff] %v1939
    %2004 = vst [vmem:[#allocation2 + $0x180] sm:$0xff] %v1940
    %2005 = vst [vmem:[#allocation2 + $0x188] sm:$0xff] %v1941
    %2006 = vst [vmem:[#allocation2 + $0x190] sm:$0xff] %v1942
    %2007 = vst [vmem:[#allocation2 + $0x198] sm:$0xff] %v1943
    %2008 = vst [vmem:[#allocation2 + $0x1a0] sm:$0xff] %v1944
    %2009 = vst [vmem:[#allocation2 + $0x1a8] sm:$0xff] %v1945
    %2010 = vst [vmem:[#allocation2 + $0x1b0] sm:$0xff] %v1946
    %2011 = vst [vmem:[#allocation2 + $0x1b8] sm:$0xff] %v1947
    %2012 = vst [vmem:[#allocation2 + $0x1c0] sm:$0xff] %v1948
    %2013 = vst [vmem:[#allocation2 + $0x1c8] sm:$0xff] %v1949
    %2014 = vst [vmem:[#allocation2 + $0x1d0] sm:$0xff] %v1950
    %2015 = vst [vmem:[#allocation2 + $0x1d8] sm:$0xff] %v1951
    %2016 = vst [vmem:[#allocation2 + $0x1e0] sm:$0xff] %v1952
    %2017 = vst [vmem:[#allocation2 + $0x1e8] sm:$0xff] %v1953
    %2018 = vst [vmem:[#allocation2 + $0x1f0] sm:$0xff] %v1954
    %2019 = vst [vmem:[#allocation2 + $0x1f8] sm:$0xff] %v1955
    // Predicated region
    $region38: #{forward.1} parent=1 // pred_check
      _
    $region39: #{forward.1} parent=1 // pred_check_branch
      %2021 = sbr.rel (0) target = $region41
    $region40: #{forward.1} parent=1 // pred_region
      %s2023 = ssub.s32 8192, 8192
      %2024 = vsyncadd [#allocation3], %s2023
      %s2025 = sshll.u32 [#allocation2], 4
      %s2026 = int_to_ptr.vmem [resolvable:$true] %s2025
      %2031 = dma.vmem_to_hbm [thread:$0]  %s2026, 8192, %s9, [#allocation3], 512, 512, 32
    $region41: #{forward.1} parent=1 // pred_fallthru
      _
    // Predicated region
    $region42: #{forward.1} parent=1 // pred_check
      _
    $region43: #{forward.1} parent=1 // pred_check_branch
      %2033 = sbr.rel (0) target = $region45
    $region44: #{forward.1} parent=1 // pred_region
      %2034 = dma.done [#allocation3], 8192
    $region45: #{forward.1} parent=1 // pred_fallthru
      _
    %2035 = vsyncpa [#allocation3], 1

</llo_original>
